<compile_context>
chip_gen: v6e
topology: v6e:2x2x1
jax: 0.10.0
libtpu: 0.0.40
codegen_flags: <defaults>
</compile_context>

<pallas_src>
import functools

import jax
import jax.numpy as jnp
from jax.experimental import pallas as pl
from jax.experimental.pallas import tpu as pltpu


def _round_up(x, m):
    return ((x + m - 1) // m) * m


def _mlp_kernel(num_hidden, use_bf16, x_ref, *refs):
    """Whole MLP for one lane-tile of points.

    refs = (w0, b0, w1, b1, ..., w_h, b_h, w_out, b_out, o_ref)
      w0:    (L, 3)   b0:    (L, 1)
      w_i:   (L, L)   b_i:   (L, 1)
      w_out: (L, 1)   b_out: (1, 1)
      x_ref: (3, tile_n)   o_ref: (1, tile_n)
    """
    o_ref = refs[-1]
    p = refs[:-1]
    cdt = jnp.bfloat16 if use_bf16 else jnp.float32

    x = x_ref[...]                                        # (3, tile_n) f32

    # Layer 0 (K == 3): three broadcast multiply-adds on the VPU, not the MXU.
    w0 = p[0][...]                                        # (L, 3)
    b0 = p[1][...]                                        # (L, 1)
    h = (b0
         + w0[:, 0:1] * x[0:1, :]
         + w0[:, 1:2] * x[1:2, :]
         + w0[:, 2:3] * x[2:3, :])                        # (L, tile_n)
    h = jnp.maximum(h, 0.0)

    # Hidden layers: (L, L) @ (L, tile_n) on the MXU, lane-dense N = tile_n.
    idx = 2
    for _ in range(num_hidden):
        w = p[idx][...]                                   # (L, L)
        b = p[idx + 1][...]                               # (L, 1)
        z = jnp.dot(w.astype(cdt), h.astype(cdt),
                    preferred_element_type=jnp.float32)   # (L, tile_n) f32
        h = jnp.maximum(z + b, 0.0)
        idx += 2

    # Output layer (out_features == 1): elementwise mul + sublane reduce (XLU).
    w_out = p[idx][...]                                   # (L, 1)
    b_out = p[idx + 1][...]                               # (1, 1)
    o_ref[...] = jnp.sum(w_out * h, axis=0, keepdims=True) + b_out


def ssd_sdf_forward(x, params, *, tile_n=1024, use_bf16=True):
    """x: (N, 3) float32 -> (N,) float32 (torch.squeeze of (N, 1))."""
    n, in_dim = x.shape
    assert in_dim == 3
    assert len(params) >= 2
    num_hidden = len(params) - 2

    # Keep tile_n a multiple of 256 (MXU output dim on v6e/v7x; also a multiple
    # of 128 for v5e lanes), but do not over-pad tiny inputs.
    tile_n = max(256, min(_round_up(tile_n, 256), _round_up(n, 256)))
    n_pad = _round_up(n, tile_n)
    grid = n_pad // tile_n

    # Batch on lanes: transpose once in XLA and zero-pad up to the tile grid.
    xT = x.T                                              # (3, N)
    if n_pad != n:
        xT = jnp.pad(xT, ((0, 0), (0, n_pad - n)))

    flat_params = []
    for w, b in params:
        flat_params += [w, b]

    x_spec = pl.BlockSpec((3, tile_n), lambda i: (0, i))
    # Parameters are small; keep each whole in VMEM with a constant index_map
    # (no re-fetch across grid steps).
    param_specs = [pl.BlockSpec(p.shape, lambda i: (0, 0)) for p in flat_params]
    # Lane-dense output: one contiguous (1, tile_n) row per grid step.
    out_spec = pl.BlockSpec((1, tile_n), lambda i: (0, i))

    kernel = functools.partial(_mlp_kernel, num_hidden, use_bf16)

    out = pl.pallas_call(
        kernel,
        out_shape=jax.ShapeDtypeStruct((1, n_pad), jnp.float32),
        grid_spec=pltpu.PrefetchScalarGridSpec(
            num_scalar_prefetch=0,
            grid=(grid,),
            in_specs=[x_spec] + param_specs,
            out_specs=out_spec,
        ),
        compiler_params=pltpu.CompilerParams(
            dimension_semantics=("parallel",),
            vmem_limit_bytes=64 * 1024 * 1024,
        ),
    )(xT, *flat_params)

    # (1, n_pad) -> drop padding -> (N,), then squeeze like torch.squeeze
    # (N == 1 collapses to a scalar, same as PyTorch).
    return jnp.squeeze(out[0, :n])


def init_params(key, layer_size, layer_number):
    """Deterministic parameters in the kernel's layout.

    Correspondence to PyTorch nn.Linear (weight: (out, in), bias: (out,)):
      first/hidden layers: w == weight (out, in);  b == bias[:, None]  (out, 1)
      final layer:         w == weight.T  (in, 1); b == bias[None, :]  (1, 1)
    """
    dims = [3] + [layer_size] * (layer_number + 1) + [1]
    params = []
    for i in range(len(dims) - 1):
        fan_in, fan_out = dims[i], dims[i + 1]
        key, kw, kb = jax.random.split(key, 3)
        bound = 1.0 / (fan_in ** 0.5)
        if i < len(dims) - 2:
            w = jax.random.uniform(kw, (fan_out, fan_in), jnp.float32, -bound, bound)
        else:
            w = jax.random.uniform(kw, (fan_in, fan_out), jnp.float32, -bound, bound)
        b = jax.random.uniform(kb, (fan_out, 1), jnp.float32, -bound, bound)
        params.append((w, b))
    return params


def ssd_sdf_reference(x, params):
    """Pure-JAX, PyTorch-style (row-major, f32) reference."""
    h = x                                                 # (N, 3)
    for w, b in params[:-1]:
        h = jnp.maximum(h @ w.T + b[:, 0], 0.0)           # w: (out, in), b: (out, 1)
    w, b = params[-1]                                     # (L, 1), (1, 1)
    return jnp.squeeze(h @ w + b[:, 0])


if __name__ == "__main__":
    layer_size = 32
    layer_number = 2
    n_points = 2000          # pads to 2048 -> 2 lane-tiles of 1024 (feeds both v7x cores)

    key = jax.random.PRNGKey(0)
    kx, kp = jax.random.split(key)
    x = jax.random.normal(kx, (n_points, 3), jnp.float32)
    params = init_params(kp, layer_size, layer_number)

    y_ref = ssd_sdf_reference(x, params)

    # Exact-f32 path: tight check against the pure-JAX reference.
    y_f32 = jax.block_until_ready(ssd_sdf_forward(x, params, use_bf16=False))
    assert y_f32.shape == (n_points,)
    assert jnp.allclose(y_f32, y_ref, atol=1e-4, rtol=1e-4)

    # bf16-MXU fast path (default on v6e/v7x): looser check vs the f32 reference.
    y_bf16 = jax.block_until_ready(ssd_sdf_forward(x, params, use_bf16=True))
    assert y_bf16.shape == (n_points,)
    assert jnp.allclose(y_bf16, y_ref, atol=5e-2, rtol=5e-2)

    print("KERNEL_OK")
</pallas_src>

<mosaic_0001>
module attributes {stable_mosaic.version = 11 : i64} {
  func.func @_mlp_kernel(%arg0: i32, %arg1: memref<3x1024xf32, #tpu.memory_space<vmem>>, %arg2: memref<32x3xf32, #tpu.memory_space<vmem>>, %arg3: memref<32x1xf32, #tpu.memory_space<vmem>>, %arg4: memref<32x32xf32, #tpu.memory_space<vmem>>, %arg5: memref<32x1xf32, #tpu.memory_space<vmem>>, %arg6: memref<32x32xf32, #tpu.memory_space<vmem>>, %arg7: memref<32x1xf32, #tpu.memory_space<vmem>>, %arg8: memref<32x1xf32, #tpu.memory_space<vmem>>, %arg9: memref<1x1xf32, #tpu.memory_space<vmem>>, %arg10: memref<1x1024xf32, #tpu.memory_space<vmem>>) attributes {dimension_semantics = [#tpu.dimension_semantics<parallel>], iteration_bounds = array<i64: 2>, scalar_prefetch = 0 : i64, scratch_operands = 0 : i64, tpu.core_type = #tpu.core_type<tc>, window_params = [{transform_indices = @transform_0, window_bounds = array<i64: 3, 1024>}, {pipeline_mode = #tpu.pipeline_mode<synchronous>, transform_indices = @transform_1, window_bounds = array<i64: 32, 3>}, {pipeline_mode = #tpu.pipeline_mode<synchronous>, transform_indices = @transform_2, window_bounds = array<i64: 32, 1>}, {pipeline_mode = #tpu.pipeline_mode<synchronous>, transform_indices = @transform_3, window_bounds = array<i64: 32, 32>}, {pipeline_mode = #tpu.pipeline_mode<synchronous>, transform_indices = @transform_4, window_bounds = array<i64: 32, 1>}, {pipeline_mode = #tpu.pipeline_mode<synchronous>, transform_indices = @transform_5, window_bounds = array<i64: 32, 32>}, {pipeline_mode = #tpu.pipeline_mode<synchronous>, transform_indices = @transform_6, window_bounds = array<i64: 32, 1>}, {pipeline_mode = #tpu.pipeline_mode<synchronous>, transform_indices = @transform_7, window_bounds = array<i64: 32, 1>}, {pipeline_mode = #tpu.pipeline_mode<synchronous>, transform_indices = @transform_8, window_bounds = array<i64: 1, 1>}, {transform_indices = @transform_9, window_bounds = array<i64: 1, 1024>}]} {
    %c0 = arith.constant 0 : index
    %c0_0 = arith.constant 0 : index
    %0 = vector.load %arg1[%c0, %c0_0] : memref<3x1024xf32, #tpu.memory_space<vmem>>, vector<3x1024xf32>
    %c0_1 = arith.constant 0 : index
    %c0_2 = arith.constant 0 : index
    %1 = vector.load %arg2[%c0_1, %c0_2] : memref<32x3xf32, #tpu.memory_space<vmem>>, vector<32x3xf32>
    %c0_3 = arith.constant 0 : index
    %c0_4 = arith.constant 0 : index
    %2 = vector.load %arg3[%c0_3, %c0_4] : memref<32x1xf32, #tpu.memory_space<vmem>>, vector<32x1xf32>
    %3 = vector.extract_strided_slice %1 {offsets = [0, 0], sizes = [32, 1], strides = [1, 1]} : vector<32x3xf32> to vector<32x1xf32>
    %4 = vector.extract_strided_slice %0 {offsets = [0, 0], sizes = [1, 1024], strides = [1, 1]} : vector<3x1024xf32> to vector<1x1024xf32>
    %5 = vector.broadcast %3 : vector<32x1xf32> to vector<32x1024xf32>
    %6 = vector.broadcast %4 : vector<1x1024xf32> to vector<32x1024xf32>
    %7 = arith.mulf %5, %6 : vector<32x1024xf32>
    %8 = vector.broadcast %2 : vector<32x1xf32> to vector<32x1024xf32>
    %9 = arith.addf %8, %7 : vector<32x1024xf32>
    %10 = vector.extract_strided_slice %1 {offsets = [0, 1], sizes = [32, 1], strides = [1, 1]} : vector<32x3xf32> to vector<32x1xf32>
    %11 = vector.extract_strided_slice %0 {offsets = [1, 0], sizes = [1, 1024], strides = [1, 1]} : vector<3x1024xf32> to vector<1x1024xf32>
    %12 = vector.broadcast %10 : vector<32x1xf32> to vector<32x1024xf32>
    %13 = vector.broadcast %11 : vector<1x1024xf32> to vector<32x1024xf32>
    %14 = arith.mulf %12, %13 : vector<32x1024xf32>
    %15 = arith.addf %9, %14 : vector<32x1024xf32>
    %16 = vector.extract_strided_slice %1 {offsets = [0, 2], sizes = [32, 1], strides = [1, 1]} : vector<32x3xf32> to vector<32x1xf32>
    %17 = vector.extract_strided_slice %0 {offsets = [2, 0], sizes = [1, 1024], strides = [1, 1]} : vector<3x1024xf32> to vector<1x1024xf32>
    %18 = vector.broadcast %16 : vector<32x1xf32> to vector<32x1024xf32>
    %19 = vector.broadcast %17 : vector<1x1024xf32> to vector<32x1024xf32>
    %20 = arith.mulf %18, %19 : vector<32x1024xf32>
    %21 = arith.addf %15, %20 : vector<32x1024xf32>
    %cst = arith.constant 0.000000e+00 : f32
    %22 = vector.broadcast %cst : f32 to vector<32x1024xf32>
    %23 = arith.maximumf %21, %22 : vector<32x1024xf32>
    %c0_5 = arith.constant 0 : index
    %c0_6 = arith.constant 0 : index
    %24 = vector.load %arg4[%c0_5, %c0_6] : memref<32x32xf32, #tpu.memory_space<vmem>>, vector<32x32xf32>
    %c0_7 = arith.constant 0 : index
    %c0_8 = arith.constant 0 : index
    %25 = vector.load %arg5[%c0_7, %c0_8] : memref<32x1xf32, #tpu.memory_space<vmem>>, vector<32x1xf32>
    %cst_9 = arith.constant dense<0.000000e+00> : vector<32x1024xf32>
    %26 = tpu.matmul %24, %23, %cst_9 {dimension_numbers = #tpu.dot_dimension_numbers<[1], [0], [0], [1], [0, 0, 1, 1], [], []>} : vector<32x32xf32>, vector<32x1024xf32>, vector<32x1024xf32> -> vector<32x1024xf32>
    %27 = vector.broadcast %25 : vector<32x1xf32> to vector<32x1024xf32>
    %28 = arith.addf %26, %27 : vector<32x1024xf32>
    %cst_10 = arith.constant 0.000000e+00 : f32
    %29 = vector.broadcast %cst_10 : f32 to vector<32x1024xf32>
    %30 = arith.maximumf %28, %29 : vector<32x1024xf32>
    %c0_11 = arith.constant 0 : index
    %c0_12 = arith.constant 0 : index
    %31 = vector.load %arg6[%c0_11, %c0_12] : memref<32x32xf32, #tpu.memory_space<vmem>>, vector<32x32xf32>
    %c0_13 = arith.constant 0 : index
    %c0_14 = arith.constant 0 : index
    %32 = vector.load %arg7[%c0_13, %c0_14] : memref<32x1xf32, #tpu.memory_space<vmem>>, vector<32x1xf32>
    %cst_15 = arith.constant dense<0.000000e+00> : vector<32x1024xf32>
    %33 = tpu.matmul %31, %30, %cst_15 {dimension_numbers = #tpu.dot_dimension_numbers<[1], [0], [0], [1], [0, 0, 1, 1], [], []>} : vector<32x32xf32>, vector<32x1024xf32>, vector<32x1024xf32> -> vector<32x1024xf32>
    %34 = vector.broadcast %32 : vector<32x1xf32> to vector<32x1024xf32>
    %35 = arith.addf %33, %34 : vector<32x1024xf32>
    %cst_16 = arith.constant 0.000000e+00 : f32
    %36 = vector.broadcast %cst_16 : f32 to vector<32x1024xf32>
    %37 = arith.maximumf %35, %36 : vector<32x1024xf32>
    %c0_17 = arith.constant 0 : index
    %c0_18 = arith.constant 0 : index
    %38 = vector.load %arg8[%c0_17, %c0_18] : memref<32x1xf32, #tpu.memory_space<vmem>>, vector<32x1xf32>
    %c0_19 = arith.constant 0 : index
    %c0_20 = arith.constant 0 : index
    %39 = vector.load %arg9[%c0_19, %c0_20] : memref<1x1xf32, #tpu.memory_space<vmem>>, vector<1x1xf32>
    %40 = vector.broadcast %38 : vector<32x1xf32> to vector<32x1024xf32>
    %41 = arith.mulf %40, %37 : vector<32x1024xf32>
    %cst_21 = arith.constant dense<0.000000e+00> : vector<1024xf32>
    %42 = vector.multi_reduction <add>, %41, %cst_21 [0] : vector<32x1024xf32> to vector<1024xf32>
    %43 = vector.shape_cast %42 : vector<1024xf32> to vector<1x1024xf32>
    %44 = vector.broadcast %39 : vector<1x1xf32> to vector<1x1024xf32>
    %45 = arith.addf %43, %44 : vector<1x1024xf32>
    %c0_22 = arith.constant 0 : index
    %c0_23 = arith.constant 0 : index
    %46 = vector.load %arg10[%c0_22, %c0_23] : memref<1x1024xf32, #tpu.memory_space<vmem>>, vector<1x1024xf32>
    tpu.vector_store %arg10[%c0_22, %c0_23], %45 {strides = array<i32>} : memref<1x1024xf32, #tpu.memory_space<vmem>>, vector<1x1024xf32>,
    return
  }
  func.func @transform_0(%arg0: i32) -> (i32, i32) {
    %c0_i32 = arith.constant 0 : i32
    %c0_i32_0 = arith.constant 0 : i32
    return %c0_i32, %arg0 : i32, i32
  }
  func.func @transform_1(%arg0: i32) -> (i32, i32) {
    %c0_i32 = arith.constant 0 : i32
    %c0_i32_0 = arith.constant 0 : i32
    %c0_i32_1 = arith.constant 0 : i32
    return %c0_i32, %c0_i32_0 : i32, i32
  }
  func.func @transform_2(%arg0: i32) -> (i32, i32) {
    %c0_i32 = arith.constant 0 : i32
    %c0_i32_0 = arith.constant 0 : i32
    %c0_i32_1 = arith.constant 0 : i32
    return %c0_i32, %c0_i32_0 : i32, i32
  }
  func.func @transform_3(%arg0: i32) -> (i32, i32) {
    %c0_i32 = arith.constant 0 : i32
    %c0_i32_0 = arith.constant 0 : i32
    %c0_i32_1 = arith.constant 0 : i32
    return %c0_i32, %c0_i32_0 : i32, i32
  }
  func.func @transform_4(%arg0: i32) -> (i32, i32) {
    %c0_i32 = arith.constant 0 : i32
    %c0_i32_0 = arith.constant 0 : i32
    %c0_i32_1 = arith.constant 0 : i32
    return %c0_i32, %c0_i32_0 : i32, i32
  }
  func.func @transform_5(%arg0: i32) -> (i32, i32) {
    %c0_i32 = arith.constant 0 : i32
    %c0_i32_0 = arith.constant 0 : i32
    %c0_i32_1 = arith.constant 0 : i32
    return %c0_i32, %c0_i32_0 : i32, i32
  }
  func.func @transform_6(%arg0: i32) -> (i32, i32) {
    %c0_i32 = arith.constant 0 : i32
    %c0_i32_0 = arith.constant 0 : i32
    %c0_i32_1 = arith.constant 0 : i32
    return %c0_i32, %c0_i32_0 : i32, i32
  }
  func.func @transform_7(%arg0: i32) -> (i32, i32) {
    %c0_i32 = arith.constant 0 : i32
    %c0_i32_0 = arith.constant 0 : i32
    %c0_i32_1 = arith.constant 0 : i32
    return %c0_i32, %c0_i32_0 : i32, i32
  }
  func.func @transform_8(%arg0: i32) -> (i32, i32) {
    %c0_i32 = arith.constant 0 : i32
    %c0_i32_0 = arith.constant 0 : i32
    %c0_i32_1 = arith.constant 0 : i32
    return %c0_i32, %c0_i32_0 : i32, i32
  }
  func.func @transform_9(%arg0: i32) -> (i32, i32) {
    %c0_i32 = arith.constant 0 : i32
    %c0_i32_0 = arith.constant 0 : i32
    return %c0_i32, %arg0 : i32, i32
  }
}

</mosaic_0001>

<llo_original>
// kernel: tpu_custom_call.1
$region0: #{tpu_custom_call.1}
  #allocation0 [shape = 'u32[]', space=smem, size = 0x4, offset = 0x4, fixed_abs, tag = 'smem constant byte address 0x4 - core index']
  #allocation1 [shape = 'u32[144,128]{1,0:T(1,128)}', space=vmem, size = 0x12000, scoped, tag = 'internal scratch']
  #allocation2 [shape = 'f32[1,1]{1,0:T(1,128)S(1)}', space=vmem, size = 0x200, scoped, tag = 'scoped memory for tpu_custom_call.1']
  %s0 = inlined_call_operand.vmem [shape: f32[3,2048], index: 0, kind: input, shape index: {}]
  %s1 = inlined_call_operand.vmem [shape: f32[32,3], index: 1, kind: input, shape index: {}]
  %s2 = inlined_call_operand.vmem [shape: f32[32,1], index: 2, kind: input, shape index: {}]
  %s3 = inlined_call_operand.vmem [shape: f32[32,32], index: 3, kind: input, shape index: {}]
  %s4 = inlined_call_operand.vmem [shape: f32[32,1], index: 4, kind: input, shape index: {}]
  %s5 = inlined_call_operand.vmem [shape: f32[32,32], index: 5, kind: input, shape index: {}]
  %s6 = inlined_call_operand.vmem [shape: f32[32,1], index: 6, kind: input, shape index: {}]
  %s7 = inlined_call_operand.vmem [shape: f32[32,1], index: 7, kind: input, shape index: {}]
  %s8 = inlined_call_operand.<no memory space> [shape: f32[1,1], index: 8, kind: input, shape index: {}]
  %s9 = inlined_call_operand.hbm [shape: f32[1,2048], index: 9, kind: output, shape index: {}]
  %s10 = sld [smem:[#allocation0]]
  $region69: #{tpu_custom_call.1} parent=0
    _
  %s12 = ssub.s32 1, %s10
  %s13 = scalar_select 0, %s12, %s10
  %v14 = vstv %s8
  %15 = vst [vmem:[#allocation2] sm:$0x1] %v14
  $region1: #{tpu_custom_call.1} parent=0
    #allocation3 [shape = 'u8[8192]{0}', space=vmem, size = 0x2000, scoped, tag = 'output window, operand 0']
    #allocation4 [shape = 's32[2]{0}', space=sflag, size = 0x8, scoped, tag = 'scoped memory for tpu_custom_call.1']
    %16 = vsyncpa [#allocation4], 0
    %s17 = scalar_lea.sflag [#allocation4], 1
    %18 = vsyncpa %s17, 0
    loop: start=0, step=1, limit=4
    $region2: #{tpu_custom_call.1} parent=1 // loop_pre_header
      _
    $region3: #{tpu_custom_call.1} parent=1 // loop_header
      %s20 = sphi 0, %s24
      %p21 = scmp.ge.s32.totalorder %s20, 4
      %s30 = sphi 0, %s32
      %s33 = sphi 0, %s30
      %s34 = sphi 0, %s33
      %s50 = sphi 0, %s34
      %s54 = sphi 0, %s54
      %s56 = sphi 0, %s54
      %s57 = sphi 0, %s56
      %s71 = sphi 0, %s57
      %s75 = sphi 0, %s75
      %s77 = sphi 0, %s75
      %s78 = sphi 0, %s77
      %s92 = sphi 0, %s78
      %s96 = sphi 0, %s96
      %s98 = sphi 0, %s96
      %s99 = sphi 0, %s98
      %s113 = sphi 0, %s99
      %s117 = sphi 0, %s117
      %s119 = sphi 0, %s117
      %s120 = sphi 0, %s119
      %s134 = sphi 0, %s120
      %s138 = sphi 0, %s138
      %s140 = sphi 0, %s138
      %s141 = sphi 0, %s140
      %s155 = sphi 0, %s141
      %s159 = sphi 0, %s159
      %s161 = sphi 0, %s159
      %s162 = sphi 0, %s161
      %s176 = sphi 0, %s162
      %s180 = sphi 0, %s180
      %s182 = sphi 0, %s180
      %s183 = sphi 0, %s182
      %s197 = sphi 0, %s183
      %s201 = sphi 0, %s201
      %s203 = sphi 0, %s201
      %s204 = sphi 0, %s203
      %s218 = sphi 0, %s204
      %s224 = sphi 0, %s226
      %s227 = sphi 0, %s224
      %s228 = sphi 0, %s227
      %s244 = sphi 0, %s228
    $region4: #{tpu_custom_call.1} parent=1 // loop_header_branch
      %23 = sbr.rel (%p21) target = $region8
    $region5: #{tpu_custom_call.1} parent=1 // loop_body
      %s25 = ssub.s32 %s20, 1
      %s26 = ssub.s32 %s20, 2
      %s27 = sadd.s32 %s20, 1
      %s28 = ssub.s32 %s20, %s27
      %p29 = scmp.eq.s32.totalorder %s28, 0
      %s31 = sadd.s32 %s30, 1
      %s32 = scalar_select %p29, %s30, %s31
      %p35 = pneg %p29
      %p36 = scmp.eq.s32.totalorder %s20, 1
      %p37 = por %p35, %p36
      %p38 = scmp.ne.s32.totalorder %s30, %s33
      %p39 = scmp.eq.s32.totalorder %s20, 0
      %p40 = por %p38, %p39
      %p41 = scmp.ne.s32.totalorder %s30, %s33
      %p42 = scmp.eq.s32.totalorder %s25, 1
      %p43 = por %p41, %p42
      %p44 = scmp.ne.s32.totalorder %s33, %s34
      %p45 = scmp.eq.s32.totalorder %s25, 0
      %p46 = por %p44, %p45
      %p47 = scmp.ne.s32.totalorder %s33, %s34
      %p48 = scmp.eq.s32.totalorder %s26, 1
      %p49 = por %p47, %p48
      %p51 = scmp.ne.s32.totalorder %s34, %s50
      %p52 = scmp.eq.s32.totalorder %s26, 0
      %p53 = por %p51, %p52
      %s55 = sadd.s32 %s54, 1
      %p58 = scmp.eq.s32.totalorder %s20, 1
      %p59 = scmp.ne.s32.totalorder %s54, %s56
      %p60 = scmp.eq.s32.totalorder %s20, 0
      %p61 = por %p59, %p60
      %p62 = scmp.ne.s32.totalorder %s54, %s56
      %p63 = scmp.eq.s32.totalorder %s25, 1
      %p64 = por %p62, %p63
      %p65 = scmp.ne.s32.totalorder %s56, %s57
      %p66 = scmp.eq.s32.totalorder %s25, 0
      %p67 = por %p65, %p66
      %p68 = scmp.ne.s32.totalorder %s56, %s57
      %p69 = scmp.eq.s32.totalorder %s26, 1
      %p70 = por %p68, %p69
      %p72 = scmp.ne.s32.totalorder %s57, %s71
      %p73 = scmp.eq.s32.totalorder %s26, 0
      %p74 = por %p72, %p73
      %s76 = sadd.s32 %s75, 1
      %p79 = scmp.eq.s32.totalorder %s20, 1
      %p80 = scmp.ne.s32.totalorder %s75, %s77
      %p81 = scmp.eq.s32.totalorder %s20, 0
      %p82 = por %p80, %p81
      %p83 = scmp.ne.s32.totalorder %s75, %s77
      %p84 = scmp.eq.s32.totalorder %s25, 1
      %p85 = por %p83, %p84
      %p86 = scmp.ne.s32.totalorder %s77, %s78
      %p87 = scmp.eq.s32.totalorder %s25, 0
      %p88 = por %p86, %p87
      %p89 = scmp.ne.s32.totalorder %s77, %s78
      %p90 = scmp.eq.s32.totalorder %s26, 1
      %p91 = por %p89, %p90
      %p93 = scmp.ne.s32.totalorder %s78, %s92
      %p94 = scmp.eq.s32.totalorder %s26, 0
      %p95 = por %p93, %p94
      %s97 = sadd.s32 %s96, 1
      %p100 = scmp.eq.s32.totalorder %s20, 1
      %p101 = scmp.ne.s32.totalorder %s96, %s98
      %p102 = scmp.eq.s32.totalorder %s20, 0
      %p103 = por %p101, %p102
      %p104 = scmp.ne.s32.totalorder %s96, %s98
      %p105 = scmp.eq.s32.totalorder %s25, 1
      %p106 = por %p104, %p105
      %p107 = scmp.ne.s32.totalorder %s98, %s99
      %p108 = scmp.eq.s32.totalorder %s25, 0
      %p109 = por %p107, %p108
      %p110 = scmp.ne.s32.totalorder %s98, %s99
      %p111 = scmp.eq.s32.totalorder %s26, 1
      %p112 = por %p110, %p111
      %p114 = scmp.ne.s32.totalorder %s99, %s113
      %p115 = scmp.eq.s32.totalorder %s26, 0
      %p116 = por %p114, %p115
      %s118 = sadd.s32 %s117, 1
      %p121 = scmp.eq.s32.totalorder %s20, 1
      %p122 = scmp.ne.s32.totalorder %s117, %s119
      %p123 = scmp.eq.s32.totalorder %s20, 0
      %p124 = por %p122, %p123
      %p125 = scmp.ne.s32.totalorder %s117, %s119
      %p126 = scmp.eq.s32.totalorder %s25, 1
      %p127 = por %p125, %p126
      %p128 = scmp.ne.s32.totalorder %s119, %s120
      %p129 = scmp.eq.s32.totalorder %s25, 0
      %p130 = por %p128, %p129
      %p131 = scmp.ne.s32.totalorder %s119, %s120
      %p132 = scmp.eq.s32.totalorder %s26, 1
      %p133 = por %p131, %p132
      %p135 = scmp.ne.s32.totalorder %s120, %s134
      %p136 = scmp.eq.s32.totalorder %s26, 0
      %p137 = por %p135, %p136
      %s139 = sadd.s32 %s138, 1
      %p142 = scmp.eq.s32.totalorder %s20, 1
      %p143 = scmp.ne.s32.totalorder %s138, %s140
      %p144 = scmp.eq.s32.totalorder %s20, 0
      %p145 = por %p143, %p144
      %p146 = scmp.ne.s32.totalorder %s138, %s140
      %p147 = scmp.eq.s32.totalorder %s25, 1
      %p148 = por %p146, %p147
      %p149 = scmp.ne.s32.totalorder %s140, %s141
      %p150 = scmp.eq.s32.totalorder %s25, 0
      %p151 = por %p149, %p150
      %p152 = scmp.ne.s32.totalorder %s140, %s141
      %p153 = scmp.eq.s32.totalorder %s26, 1
      %p154 = por %p152, %p153
      %p156 = scmp.ne.s32.totalorder %s141, %s155
      %p157 = scmp.eq.s32.totalorder %s26, 0
      %p158 = por %p156, %p157
      %s160 = sadd.s32 %s159, 1
      %p163 = scmp.eq.s32.totalorder %s20, 1
      %p164 = scmp.ne.s32.totalorder %s159, %s161
      %p165 = scmp.eq.s32.totalorder %s20, 0
      %p166 = por %p164, %p165
      %p167 = scmp.ne.s32.totalorder %s159, %s161
      %p168 = scmp.eq.s32.totalorder %s25, 1
      %p169 = por %p167, %p168
      %p170 = scmp.ne.s32.totalorder %s161, %s162
      %p171 = scmp.eq.s32.totalorder %s25, 0
      %p172 = por %p170, %p171
      %p173 = scmp.ne.s32.totalorder %s161, %s162
      %p174 = scmp.eq.s32.totalorder %s26, 1
      %p175 = por %p173, %p174
      %p177 = scmp.ne.s32.totalorder %s162, %s176
      %p178 = scmp.eq.s32.totalorder %s26, 0
      %p179 = por %p177, %p178
      %s181 = sadd.s32 %s180, 1
      %p184 = scmp.eq.s32.totalorder %s20, 1
      %p185 = scmp.ne.s32.totalorder %s180, %s182
      %p186 = scmp.eq.s32.totalorder %s20, 0
      %p187 = por %p185, %p186
      %p188 = scmp.ne.s32.totalorder %s180, %s182
      %p189 = scmp.eq.s32.totalorder %s25, 1
      %p190 = por %p188, %p189
      %p191 = scmp.ne.s32.totalorder %s182, %s183
      %p192 = scmp.eq.s32.totalorder %s25, 0
      %p193 = por %p191, %p192
      %p194 = scmp.ne.s32.totalorder %s182, %s183
      %p195 = scmp.eq.s32.totalorder %s26, 1
      %p196 = por %p194, %p195
      %p198 = scmp.ne.s32.totalorder %s183, %s197
      %p199 = scmp.eq.s32.totalorder %s26, 0
      %p200 = por %p198, %p199
      %s202 = sadd.s32 %s201, 1
      %p205 = scmp.eq.s32.totalorder %s20, 1
      %p206 = scmp.ne.s32.totalorder %s201, %s203
      %p207 = scmp.eq.s32.totalorder %s20, 0
      %p208 = por %p206, %p207
      %p209 = scmp.ne.s32.totalorder %s201, %s203
      %p210 = scmp.eq.s32.totalorder %s25, 1
      %p211 = por %p209, %p210
      %p212 = scmp.ne.s32.totalorder %s203, %s204
      %p213 = scmp.eq.s32.totalorder %s25, 0
      %p214 = por %p212, %p213
      %p215 = scmp.ne.s32.totalorder %s203, %s204
      %p216 = scmp.eq.s32.totalorder %s26, 1
      %p217 = por %p215, %p216
      %p219 = scmp.ne.s32.totalorder %s204, %s218
      %p220 = scmp.eq.s32.totalorder %s26, 0
      %p221 = por %p219, %p220
      %s222 = ssub.s32 %s20, %s27
      %p223 = scmp.eq.s32.totalorder %s222, 0
      %s225 = sadd.s32 %s224, 1
      %s226 = scalar_select %p223, %s224, %s225
      %p229 = pneg %p223
      %p230 = scmp.eq.s32.totalorder %s20, 1
      %p231 = por %p229, %p230
      %p232 = scmp.ne.s32.totalorder %s224, %s227
      %p233 = scmp.eq.s32.totalorder %s20, 0
      %p234 = por %p232, %p233
      %p235 = scmp.ne.s32.totalorder %s224, %s227
      %p236 = scmp.eq.s32.totalorder %s25, 1
      %p237 = por %p235, %p236
      %p238 = scmp.ne.s32.totalorder %s227, %s228
      %p239 = scmp.eq.s32.totalorder %s25, 0
      %p240 = por %p238, %p239
      %p241 = scmp.ne.s32.totalorder %s227, %s228
      %p242 = scmp.eq.s32.totalorder %s26, 1
      %p243 = por %p241, %p242
      %p245 = scmp.ne.s32.totalorder %s228, %s244
      %p246 = scmp.eq.s32.totalorder %s26, 0
      %p247 = por %p245, %p246
      %p248 = scmp.le.s32.totalorder 1, %s20
      %p249 = scmp.lt.s32.totalorder %s20, 3
      %p250 = pnand %p248, %p249
      %p251 = pneg %p250
      // Predicated region
      $region9: #{tpu_custom_call.1} parent=5 // pred_check
        _
      $region10: #{tpu_custom_call.1} parent=5 // pred_check_branch
        %253 = sbr.rel (%p250) target = $region12
      $region11: #{tpu_custom_call.1} parent=5 // pred_region
        %s254 = ssub.s32 %s20, 1
        // Predicated region
        $region13: #{tpu_custom_call.1} parent=11 // pred_check
          %p255 = pneg %p67
        $region14: #{tpu_custom_call.1} parent=11 // pred_check_branch
          %257 = sbr.rel (%p255) target = $region16
        $region15: #{tpu_custom_call.1} parent=11 // pred_region
          _
        $region16: #{tpu_custom_call.1} parent=11 // pred_fallthru
          _
        // Predicated region
        $region17: #{tpu_custom_call.1} parent=11 // pred_check
          %p258 = pneg %p88
        $region18: #{tpu_custom_call.1} parent=11 // pred_check_branch
          %260 = sbr.rel (%p258) target = $region20
        $region19: #{tpu_custom_call.1} parent=11 // pred_region
          _
        $region20: #{tpu_custom_call.1} parent=11 // pred_fallthru
          _
        // Predicated region
        $region21: #{tpu_custom_call.1} parent=11 // pred_check
          %p261 = pneg %p109
        $region22: #{tpu_custom_call.1} parent=11 // pred_check_branch
          %263 = sbr.rel (%p261) target = $region24
        $region23: #{tpu_custom_call.1} parent=11 // pred_region
          _
        $region24: #{tpu_custom_call.1} parent=11 // pred_fallthru
          _
        // Predicated region
        $region25: #{tpu_custom_call.1} parent=11 // pred_check
          %p264 = pneg %p130
        $region26: #{tpu_custom_call.1} parent=11 // pred_check_branch
          %266 = sbr.rel (%p264) target = $region28
        $region27: #{tpu_custom_call.1} parent=11 // pred_region
          _
        $region28: #{tpu_custom_call.1} parent=11 // pred_fallthru
          _
        // Predicated region
        $region29: #{tpu_custom_call.1} parent=11 // pred_check
          %p267 = pneg %p151
        $region30: #{tpu_custom_call.1} parent=11 // pred_check_branch
          %269 = sbr.rel (%p267) target = $region32
        $region31: #{tpu_custom_call.1} parent=11 // pred_region
          _
        $region32: #{tpu_custom_call.1} parent=11 // pred_fallthru
          _
        // Predicated region
        $region33: #{tpu_custom_call.1} parent=11 // pred_check
          %p270 = pneg %p172
        $region34: #{tpu_custom_call.1} parent=11 // pred_check_branch
          %272 = sbr.rel (%p270) target = $region36
        $region35: #{tpu_custom_call.1} parent=11 // pred_region
          _
        $region36: #{tpu_custom_call.1} parent=11 // pred_fallthru
          _
        // Predicated region
        $region37: #{tpu_custom_call.1} parent=11 // pred_check
          %p273 = pneg %p193
        $region38: #{tpu_custom_call.1} parent=11 // pred_check_branch
          %275 = sbr.rel (%p273) target = $region40
        $region39: #{tpu_custom_call.1} parent=11 // pred_region
          _
        $region40: #{tpu_custom_call.1} parent=11 // pred_fallthru
          _
        // Predicated region
        $region41: #{tpu_custom_call.1} parent=11 // pred_check
          %p276 = pneg %p214
        $region42: #{tpu_custom_call.1} parent=11 // pred_check_branch
          %278 = sbr.rel (%p276) target = $region44
        $region43: #{tpu_custom_call.1} parent=11 // pred_region
          _
        $region44: #{tpu_custom_call.1} parent=11 // pred_fallthru
          _
      $region12: #{tpu_custom_call.1} parent=5 // pred_fallthru
        _
      %p279 = scmp.lt.s32.totalorder %s20, 2
      // Predicated region
      $region45: #{tpu_custom_call.1} parent=5 // pred_check
        %p280 = pneg %p279
      $region46: #{tpu_custom_call.1} parent=5 // pred_check_branch
        %282 = sbr.rel (%p280) target = $region48
      $region47: #{tpu_custom_call.1} parent=5 // pred_region
        // Predicated region
        $region49: #{tpu_custom_call.1} parent=47 // pred_check
          %p283 = pneg %p40
        $region50: #{tpu_custom_call.1} parent=47 // pred_check_branch
          %285 = sbr.rel (%p283) target = $region52
        $region51: #{tpu_custom_call.1} parent=47 // pred_region
          %s286 = smul.u32 8, %s20
          %p287 = scmp.lt.s32.totalorder %s286, 15
          %s288 = scalar_select %p287, %s286, 15
          %s289 = smul.addr %s288, 4
          %s290 = scalar_lea.vmem %s0, %s289
          %s291 = smul.u32 8, %s20
        $region52: #{tpu_custom_call.1} parent=47 // pred_fallthru
          _
      $region48: #{tpu_custom_call.1} parent=5 // pred_fallthru
        _
      %p292 = scmp.le.s32.totalorder 1, %s20
      %p293 = scmp.lt.s32.totalorder %s20, 3
      %p294 = pnand %p292, %p293
      %p295 = pneg %p294
      // Predicated region
      $region53: #{tpu_custom_call.1} parent=5 // pred_check
        _
      $region54: #{tpu_custom_call.1} parent=5 // pred_check_branch
        %297 = sbr.rel (%p294) target = $region56
      $region55: #{tpu_custom_call.1} parent=5 // pred_region
        %s298 = ssub.s32 %s20, 1
        %s299 = smul.u32 8, %s25
        %p300 = scmp.lt.s32.totalorder %s299, 15
        %s301 = scalar_select %p300, %s299, 15
        %s302 = smul.addr %s301, 4
        %s303 = scalar_lea.vmem %s0, %s302
        %p304 = pneg %p46
        %p305 = pneg %p43
        %p306 = pneg %p67
        %p307 = pneg %p64
        %p308 = pneg %p88
        %p309 = pneg %p85
        %p310 = pneg %p109
        %p311 = pneg %p106
        %p312 = pneg %p130
        %p313 = pneg %p127
        %p314 = pneg %p151
        %p315 = pneg %p148
        %p316 = pneg %p172
        %p317 = pneg %p169
        %p318 = pneg %p193
        %p319 = pneg %p190
        %p320 = pneg %p214
        %p321 = pneg %p211
        %p322 = pneg %p240
        %p323 = pneg %p237
        %s324 = sand.u32 %s227, 1
        %s325 = scalar_lea.sflag [#allocation4], %s324
        %s326 = sand.u32 %s227, 1
        %s327 = smul.addr %s326, 8
        %s328 = scalar_lea.vmem [#allocation3], %s327
        %s329 = smul.u32 8, %s25
        %p330 = scmp.lt.s32.totalorder %s329, 15
        %s331 = scalar_select %p330, %s329, 15
        %s332 = smul.addr %s331, 4
        %s333 = scalar_lea.vmem %s0, %s332
        %s334 = smul.u32 8, %s25
        %s335 = smul.u32 8, %s25
        %v336 = vld [vmem:[%s333] sm:$0x77]
        %v337 = vld [vmem:[%s333 + $0x8] sm:$0x77]
        %v338 = vld [vmem:[%s333 + $0x10] sm:$0x77]
        %v339 = vld [vmem:[%s333 + $0x18] sm:$0x77]
        %v340 = vld [vmem:[%s1] sm:$0xff]
        %v341 = vld [vmem:[%s1 + $0x8] sm:$0xff]
        %v342 = vld [vmem:[%s1 + $0x10] sm:$0xff]
        %v343 = vld [vmem:[%s1 + $0x18] sm:$0xff]
        %v344 = vld [vmem:[%s2] sm:$0xff]
        %v345 = vld [vmem:[%s2 + $0x8] sm:$0xff]
        %v346 = vld [vmem:[%s2 + $0x10] sm:$0xff]
        %v347 = vld [vmem:[%s2 + $0x18] sm:$0xff]
        %349 = vset.pattern.permute.xlu0 0
        %350 = vperm.xlu0 %349, %v340
        %v351 = vpop.permute.xlu0 %350
        %354 = vset.pattern.permute.xlu0 0
        %355 = vperm.xlu0 %354, %v341
        %v356 = vpop.permute.xlu0 %355
        %359 = vset.pattern.permute.xlu0 0
        %360 = vperm.xlu0 %359, %v342
        %v361 = vpop.permute.xlu0 %360
        %364 = vset.pattern.permute.xlu0 0
        %365 = vperm.xlu0 %364, %v343
        %v366 = vpop.permute.xlu0 %365
        %v372 = vlaneseq
        %v373 = vshrl.u32 %v372, 7
        %v374 = vsub.s32 0, %v373
        %v375 = vrot.slane %v336, %v374
        %v376 = vlaneseq
        %v377 = vshrl.u32 %v376, 7
        %v378 = vsub.s32 4, %v377
        %v379 = vrot.slane %v336, %v378
        %v380 = vlaneseq
        %v381 = vshrl.u32 %v380, 7
        %v382 = vsub.s32 0, %v381
        %v383 = vrot.slane %v337, %v382
        %v384 = vlaneseq
        %v385 = vshrl.u32 %v384, 7
        %v386 = vsub.s32 4, %v385
        %v387 = vrot.slane %v337, %v386
        %v388 = vlaneseq
        %v389 = vshrl.u32 %v388, 7
        %v390 = vsub.s32 0, %v389
        %v391 = vrot.slane %v338, %v390
        %v392 = vlaneseq
        %v393 = vshrl.u32 %v392, 7
        %v394 = vsub.s32 4, %v393
        %v395 = vrot.slane %v338, %v394
        %v396 = vlaneseq
        %v397 = vshrl.u32 %v396, 7
        %v398 = vsub.s32 0, %v397
        %v399 = vrot.slane %v339, %v398
        %v400 = vlaneseq
        %v401 = vshrl.u32 %v400, 7
        %v402 = vsub.s32 4, %v401
        %v403 = vrot.slane %v339, %v402
        %v412 = vlaneseq
        %v413 = vshrl.u32 %v412, 7
        %v414 = vsub.s32 0, %v413
        %v415 = vrot.slane %v375, %v414
        %v416 = vlaneseq
        %v417 = vshrl.u32 %v416, 7
        %v418 = vsub.s32 0, %v417
        %v419 = vrot.slane %v379, %v418
        %v420 = vlaneseq
        %v421 = vshrl.u32 %v420, 7
        %v422 = vsub.s32 0, %v421
        %v423 = vrot.slane %v383, %v422
        %v424 = vlaneseq
        %v425 = vshrl.u32 %v424, 7
        %v426 = vsub.s32 0, %v425
        %v427 = vrot.slane %v387, %v426
        %v428 = vlaneseq
        %v429 = vshrl.u32 %v428, 7
        %v430 = vsub.s32 0, %v429
        %v431 = vrot.slane %v391, %v430
        %v432 = vlaneseq
        %v433 = vshrl.u32 %v432, 7
        %v434 = vsub.s32 0, %v433
        %v435 = vrot.slane %v395, %v434
        %v436 = vlaneseq
        %v437 = vshrl.u32 %v436, 7
        %v438 = vsub.s32 0, %v437
        %v439 = vrot.slane %v399, %v438
        %v440 = vlaneseq
        %v441 = vshrl.u32 %v440, 7
        %v442 = vsub.s32 0, %v441
        %v443 = vrot.slane %v403, %v442
        %v444 = vmul.f32 %v351, %v415
        %v445 = vmul.f32 %v351, %v419
        %v446 = vmul.f32 %v351, %v423
        %v447 = vmul.f32 %v351, %v427
        %v448 = vmul.f32 %v351, %v431
        %v449 = vmul.f32 %v351, %v435
        %v450 = vmul.f32 %v351, %v439
        %v451 = vmul.f32 %v351, %v443
        %v452 = vmul.f32 %v356, %v415
        %v453 = vmul.f32 %v356, %v419
        %v454 = vmul.f32 %v356, %v423
        %v455 = vmul.f32 %v356, %v427
        %v456 = vmul.f32 %v356, %v431
        %v457 = vmul.f32 %v356, %v435
        %v458 = vmul.f32 %v356, %v439
        %v459 = vmul.f32 %v356, %v443
        %v460 = vmul.f32 %v361, %v415
        %v461 = vmul.f32 %v361, %v419
        %v462 = vmul.f32 %v361, %v423
        %v463 = vmul.f32 %v361, %v427
        %v464 = vmul.f32 %v361, %v431
        %v465 = vmul.f32 %v361, %v435
        %v466 = vmul.f32 %v361, %v439
        %v467 = vmul.f32 %v361, %v443
        %v468 = vmul.f32 %v366, %v415
        %v469 = vmul.f32 %v366, %v419
        %v470 = vmul.f32 %v366, %v423
        %v471 = vmul.f32 %v366, %v427
        %v472 = vmul.f32 %v366, %v431
        %v473 = vmul.f32 %v366, %v435
        %v474 = vmul.f32 %v366, %v439
        %v475 = vmul.f32 %v366, %v443
        %477 = vset.pattern.permute.xlu0 0
        %478 = vperm.xlu0 %477, %v344
        %v479 = vpop.permute.xlu0 %478
        %482 = vset.pattern.permute.xlu0 0
        %483 = vperm.xlu0 %482, %v345
        %v484 = vpop.permute.xlu0 %483
        %487 = vset.pattern.permute.xlu0 0
        %488 = vperm.xlu0 %487, %v346
        %v489 = vpop.permute.xlu0 %488
        %492 = vset.pattern.permute.xlu0 0
        %493 = vperm.xlu0 %492, %v347
        %v494 = vpop.permute.xlu0 %493
        %v496 = vadd.f32 %v479, %v444
        %v497 = vadd.f32 %v479, %v445
        %v498 = vadd.f32 %v479, %v446
        %v499 = vadd.f32 %v479, %v447
        %v500 = vadd.f32 %v479, %v448
        %v501 = vadd.f32 %v479, %v449
        %v502 = vadd.f32 %v479, %v450
        %v503 = vadd.f32 %v479, %v451
        %v504 = vadd.f32 %v484, %v452
        %v505 = vadd.f32 %v484, %v453
        %v506 = vadd.f32 %v484, %v454
        %v507 = vadd.f32 %v484, %v455
        %v508 = vadd.f32 %v484, %v456
        %v509 = vadd.f32 %v484, %v457
        %v510 = vadd.f32 %v484, %v458
        %v511 = vadd.f32 %v484, %v459
        %v512 = vadd.f32 %v489, %v460
        %v513 = vadd.f32 %v489, %v461
        %v514 = vadd.f32 %v489, %v462
        %v515 = vadd.f32 %v489, %v463
        %v516 = vadd.f32 %v489, %v464
        %v517 = vadd.f32 %v489, %v465
        %v518 = vadd.f32 %v489, %v466
        %v519 = vadd.f32 %v489, %v467
        %v520 = vadd.f32 %v494, %v468
        %v521 = vadd.f32 %v494, %v469
        %v522 = vadd.f32 %v494, %v470
        %v523 = vadd.f32 %v494, %v471
        %v524 = vadd.f32 %v494, %v472
        %v525 = vadd.f32 %v494, %v473
        %v526 = vadd.f32 %v494, %v474
        %v527 = vadd.f32 %v494, %v475
        %528 = vset.pattern.permute.xlu0 1
        %529 = vperm.xlu0 %528, %v340
        %v530 = vpop.permute.xlu0 %529
        %532 = vset.pattern.permute.xlu0 1
        %533 = vperm.xlu0 %532, %v341
        %v534 = vpop.permute.xlu0 %533
        %536 = vset.pattern.permute.xlu0 1
        %537 = vperm.xlu0 %536, %v342
        %v538 = vpop.permute.xlu0 %537
        %540 = vset.pattern.permute.xlu0 1
        %541 = vperm.xlu0 %540, %v343
        %v542 = vpop.permute.xlu0 %541
        %v544 = vlaneseq
        %v545 = vshrl.u32 %v544, 7
        %v546 = vsub.s32 1, %v545
        %v547 = vrot.slane %v336, %v546
        %v548 = vlaneseq
        %v549 = vshrl.u32 %v548, 7
        %v550 = vsub.s32 5, %v549
        %v551 = vrot.slane %v336, %v550
        %v552 = vlaneseq
        %v553 = vshrl.u32 %v552, 7
        %v554 = vsub.s32 1, %v553
        %v555 = vrot.slane %v337, %v554
        %v556 = vlaneseq
        %v557 = vshrl.u32 %v556, 7
        %v558 = vsub.s32 5, %v557
        %v559 = vrot.slane %v337, %v558
        %v560 = vlaneseq
        %v561 = vshrl.u32 %v560, 7
        %v562 = vsub.s32 1, %v561
        %v563 = vrot.slane %v338, %v562
        %v564 = vlaneseq
        %v565 = vshrl.u32 %v564, 7
        %v566 = vsub.s32 5, %v565
        %v567 = vrot.slane %v338, %v566
        %v568 = vlaneseq
        %v569 = vshrl.u32 %v568, 7
        %v570 = vsub.s32 1, %v569
        %v571 = vrot.slane %v339, %v570
        %v572 = vlaneseq
        %v573 = vshrl.u32 %v572, 7
        %v574 = vsub.s32 5, %v573
        %v575 = vrot.slane %v339, %v574
        %v584 = vlaneseq
        %v585 = vshrl.u32 %v584, 7
        %v586 = vsub.s32 1, %v585
        %v587 = vrot.slane %v547, %v586
        %v588 = vlaneseq
        %v589 = vshrl.u32 %v588, 7
        %v590 = vsub.s32 1, %v589
        %v591 = vrot.slane %v551, %v590
        %v592 = vlaneseq
        %v593 = vshrl.u32 %v592, 7
        %v594 = vsub.s32 1, %v593
        %v595 = vrot.slane %v555, %v594
        %v596 = vlaneseq
        %v597 = vshrl.u32 %v596, 7
        %v598 = vsub.s32 1, %v597
        %v599 = vrot.slane %v559, %v598
        %v600 = vlaneseq
        %v601 = vshrl.u32 %v600, 7
        %v602 = vsub.s32 1, %v601
        %v603 = vrot.slane %v563, %v602
        %v604 = vlaneseq
        %v605 = vshrl.u32 %v604, 7
        %v606 = vsub.s32 1, %v605
        %v607 = vrot.slane %v567, %v606
        %v608 = vlaneseq
        %v609 = vshrl.u32 %v608, 7
        %v610 = vsub.s32 1, %v609
        %v611 = vrot.slane %v571, %v610
        %v612 = vlaneseq
        %v613 = vshrl.u32 %v612, 7
        %v614 = vsub.s32 1, %v613
        %v615 = vrot.slane %v575, %v614
        %v616 = vmul.f32 %v530, %v587
        %v617 = vmul.f32 %v530, %v591
        %v618 = vmul.f32 %v530, %v595
        %v619 = vmul.f32 %v530, %v599
        %v620 = vmul.f32 %v530, %v603
        %v621 = vmul.f32 %v530, %v607
        %v622 = vmul.f32 %v530, %v611
        %v623 = vmul.f32 %v530, %v615
        %v624 = vmul.f32 %v534, %v587
        %v625 = vmul.f32 %v534, %v591
        %v626 = vmul.f32 %v534, %v595
        %v627 = vmul.f32 %v534, %v599
        %v628 = vmul.f32 %v534, %v603
        %v629 = vmul.f32 %v534, %v607
        %v630 = vmul.f32 %v534, %v611
        %v631 = vmul.f32 %v534, %v615
        %v632 = vmul.f32 %v538, %v587
        %v633 = vmul.f32 %v538, %v591
        %v634 = vmul.f32 %v538, %v595
        %v635 = vmul.f32 %v538, %v599
        %v636 = vmul.f32 %v538, %v603
        %v637 = vmul.f32 %v538, %v607
        %v638 = vmul.f32 %v538, %v611
        %v639 = vmul.f32 %v538, %v615
        %v640 = vmul.f32 %v542, %v587
        %v641 = vmul.f32 %v542, %v591
        %v642 = vmul.f32 %v542, %v595
        %v643 = vmul.f32 %v542, %v599
        %v644 = vmul.f32 %v542, %v603
        %v645 = vmul.f32 %v542, %v607
        %v646 = vmul.f32 %v542, %v611
        %v647 = vmul.f32 %v542, %v615
        %v648 = vadd.f32 %v496, %v616
        %v649 = vadd.f32 %v497, %v617
        %v650 = vadd.f32 %v498, %v618
        %v651 = vadd.f32 %v499, %v619
        %v652 = vadd.f32 %v500, %v620
        %v653 = vadd.f32 %v501, %v621
        %v654 = vadd.f32 %v502, %v622
        %v655 = vadd.f32 %v503, %v623
        %v656 = vadd.f32 %v504, %v624
        %v657 = vadd.f32 %v505, %v625
        %v658 = vadd.f32 %v506, %v626
        %v659 = vadd.f32 %v507, %v627
        %v660 = vadd.f32 %v508, %v628
        %v661 = vadd.f32 %v509, %v629
        %v662 = vadd.f32 %v510, %v630
        %v663 = vadd.f32 %v511, %v631
        %v664 = vadd.f32 %v512, %v632
        %v665 = vadd.f32 %v513, %v633
        %v666 = vadd.f32 %v514, %v634
        %v667 = vadd.f32 %v515, %v635
        %v668 = vadd.f32 %v516, %v636
        %v669 = vadd.f32 %v517, %v637
        %v670 = vadd.f32 %v518, %v638
        %v671 = vadd.f32 %v519, %v639
        %v672 = vadd.f32 %v520, %v640
        %v673 = vadd.f32 %v521, %v641
        %v674 = vadd.f32 %v522, %v642
        %v675 = vadd.f32 %v523, %v643
        %v676 = vadd.f32 %v524, %v644
        %v677 = vadd.f32 %v525, %v645
        %v678 = vadd.f32 %v526, %v646
        %v679 = vadd.f32 %v527, %v647
        %680 = vset.pattern.permute.xlu0 2
        %681 = vperm.xlu0 %680, %v340
        %v682 = vpop.permute.xlu0 %681
        %684 = vset.pattern.permute.xlu0 2
        %685 = vperm.xlu0 %684, %v341
        %v686 = vpop.permute.xlu0 %685
        %688 = vset.pattern.permute.xlu0 2
        %689 = vperm.xlu0 %688, %v342
        %v690 = vpop.permute.xlu0 %689
        %692 = vset.pattern.permute.xlu0 2
        %693 = vperm.xlu0 %692, %v343
        %v694 = vpop.permute.xlu0 %693
        %v696 = vlaneseq
        %v697 = vshrl.u32 %v696, 7
        %v698 = vsub.s32 2, %v697
        %v699 = vrot.slane %v336, %v698
        %v700 = vlaneseq
        %v701 = vshrl.u32 %v700, 7
        %v702 = vsub.s32 6, %v701
        %v703 = vrot.slane %v336, %v702
        %v704 = vlaneseq
        %v705 = vshrl.u32 %v704, 7
        %v706 = vsub.s32 2, %v705
        %v707 = vrot.slane %v337, %v706
        %v708 = vlaneseq
        %v709 = vshrl.u32 %v708, 7
        %v710 = vsub.s32 6, %v709
        %v711 = vrot.slane %v337, %v710
        %v712 = vlaneseq
        %v713 = vshrl.u32 %v712, 7
        %v714 = vsub.s32 2, %v713
        %v715 = vrot.slane %v338, %v714
        %v716 = vlaneseq
        %v717 = vshrl.u32 %v716, 7
        %v718 = vsub.s32 6, %v717
        %v719 = vrot.slane %v338, %v718
        %v720 = vlaneseq
        %v721 = vshrl.u32 %v720, 7
        %v722 = vsub.s32 2, %v721
        %v723 = vrot.slane %v339, %v722
        %v724 = vlaneseq
        %v725 = vshrl.u32 %v724, 7
        %v726 = vsub.s32 6, %v725
        %v727 = vrot.slane %v339, %v726
        %v736 = vlaneseq
        %v737 = vshrl.u32 %v736, 7
        %v738 = vsub.s32 2, %v737
        %v739 = vrot.slane %v699, %v738
        %v740 = vlaneseq
        %v741 = vshrl.u32 %v740, 7
        %v742 = vsub.s32 2, %v741
        %v743 = vrot.slane %v703, %v742
        %v744 = vlaneseq
        %v745 = vshrl.u32 %v744, 7
        %v746 = vsub.s32 2, %v745
        %v747 = vrot.slane %v707, %v746
        %v748 = vlaneseq
        %v749 = vshrl.u32 %v748, 7
        %v750 = vsub.s32 2, %v749
        %v751 = vrot.slane %v711, %v750
        %v752 = vlaneseq
        %v753 = vshrl.u32 %v752, 7
        %v754 = vsub.s32 2, %v753
        %v755 = vrot.slane %v715, %v754
        %v756 = vlaneseq
        %v757 = vshrl.u32 %v756, 7
        %v758 = vsub.s32 2, %v757
        %v759 = vrot.slane %v719, %v758
        %v760 = vlaneseq
        %v761 = vshrl.u32 %v760, 7
        %v762 = vsub.s32 2, %v761
        %v763 = vrot.slane %v723, %v762
        %v764 = vlaneseq
        %v765 = vshrl.u32 %v764, 7
        %v766 = vsub.s32 2, %v765
        %v767 = vrot.slane %v727, %v766
        %v768 = vmul.f32 %v682, %v739
        %v769 = vmul.f32 %v682, %v743
        %v770 = vmul.f32 %v682, %v747
        %v771 = vmul.f32 %v682, %v751
        %v772 = vmul.f32 %v682, %v755
        %v773 = vmul.f32 %v682, %v759
        %v774 = vmul.f32 %v682, %v763
        %v775 = vmul.f32 %v682, %v767
        %v776 = vmul.f32 %v686, %v739
        %v777 = vmul.f32 %v686, %v743
        %v778 = vmul.f32 %v686, %v747
        %v779 = vmul.f32 %v686, %v751
        %v780 = vmul.f32 %v686, %v755
        %v781 = vmul.f32 %v686, %v759
        %v782 = vmul.f32 %v686, %v763
        %v783 = vmul.f32 %v686, %v767
        %v784 = vmul.f32 %v690, %v739
        %v785 = vmul.f32 %v690, %v743
        %v786 = vmul.f32 %v690, %v747
        %v787 = vmul.f32 %v690, %v751
        %v788 = vmul.f32 %v690, %v755
        %v789 = vmul.f32 %v690, %v759
        %v790 = vmul.f32 %v690, %v763
        %v791 = vmul.f32 %v690, %v767
        %v792 = vmul.f32 %v694, %v739
        %v793 = vmul.f32 %v694, %v743
        %v794 = vmul.f32 %v694, %v747
        %v795 = vmul.f32 %v694, %v751
        %v796 = vmul.f32 %v694, %v755
        %v797 = vmul.f32 %v694, %v759
        %v798 = vmul.f32 %v694, %v763
        %v799 = vmul.f32 %v694, %v767
        %v800 = vadd.f32 %v648, %v768
        %v801 = vadd.f32 %v649, %v769
        %v802 = vadd.f32 %v650, %v770
        %v803 = vadd.f32 %v651, %v771
        %v804 = vadd.f32 %v652, %v772
        %v805 = vadd.f32 %v653, %v773
        %v806 = vadd.f32 %v654, %v774
        %v807 = vadd.f32 %v655, %v775
        %v808 = vadd.f32 %v656, %v776
        %v809 = vadd.f32 %v657, %v777
        %v810 = vadd.f32 %v658, %v778
        %v811 = vadd.f32 %v659, %v779
        %v812 = vadd.f32 %v660, %v780
        %v813 = vadd.f32 %v661, %v781
        %v814 = vadd.f32 %v662, %v782
        %v815 = vadd.f32 %v663, %v783
        %v816 = vadd.f32 %v664, %v784
        %v817 = vadd.f32 %v665, %v785
        %v818 = vadd.f32 %v666, %v786
        %v819 = vadd.f32 %v667, %v787
        %v820 = vadd.f32 %v668, %v788
        %v821 = vadd.f32 %v669, %v789
        %v822 = vadd.f32 %v670, %v790
        %v823 = vadd.f32 %v671, %v791
        %v824 = vadd.f32 %v672, %v792
        %v825 = vadd.f32 %v673, %v793
        %v826 = vadd.f32 %v674, %v794
        %v827 = vadd.f32 %v675, %v795
        %v828 = vadd.f32 %v676, %v796
        %v829 = vadd.f32 %v677, %v797
        %v830 = vadd.f32 %v678, %v798
        %v831 = vadd.f32 %v679, %v799
        %v832 = vmax.f32 %v800, 0.0
        %v833 = vmax.f32 %v801, 0.0
        %v834 = vmax.f32 %v802, 0.0
        %v835 = vmax.f32 %v803, 0.0
        %v836 = vmax.f32 %v804, 0.0
        %v837 = vmax.f32 %v805, 0.0
        %v838 = vmax.f32 %v806, 0.0
        %v839 = vmax.f32 %v807, 0.0
        %v840 = vmax.f32 %v808, 0.0
        %v841 = vmax.f32 %v809, 0.0
        %v842 = vmax.f32 %v810, 0.0
        %v843 = vmax.f32 %v811, 0.0
        %v844 = vmax.f32 %v812, 0.0
        %v845 = vmax.f32 %v813, 0.0
        %v846 = vmax.f32 %v814, 0.0
        %v847 = vmax.f32 %v815, 0.0
        %v848 = vmax.f32 %v816, 0.0
        %v849 = vmax.f32 %v817, 0.0
        %v850 = vmax.f32 %v818, 0.0
        %v851 = vmax.f32 %v819, 0.0
        %v852 = vmax.f32 %v820, 0.0
        %v853 = vmax.f32 %v821, 0.0
        %v854 = vmax.f32 %v822, 0.0
        %v855 = vmax.f32 %v823, 0.0
        %v856 = vmax.f32 %v824, 0.0
        %v857 = vmax.f32 %v825, 0.0
        %v858 = vmax.f32 %v826, 0.0
        %v859 = vmax.f32 %v827, 0.0
        %v860 = vmax.f32 %v828, 0.0
        %v861 = vmax.f32 %v829, 0.0
        %v862 = vmax.f32 %v830, 0.0
        %v863 = vmax.f32 %v831, 0.0
        %v864 = vld [vmem:[%s3] sm:$0xff]
        %v865 = vld [vmem:[%s3 + $0x8] sm:$0xff]
        %v866 = vld [vmem:[%s3 + $0x10] sm:$0xff]
        %v867 = vld [vmem:[%s3 + $0x18] sm:$0xff]
        %v868 = vld [vmem:[%s4] sm:$0xff]
        %v869 = vld [vmem:[%s4 + $0x8] sm:$0xff]
        %v870 = vld [vmem:[%s4 + $0x10] sm:$0xff]
        %v871 = vld [vmem:[%s4 + $0x18] sm:$0xff]
        %873 = vset.pattern.permute.xlu0 0
        %874 = vperm.xlu0 %873, %v868
        %v875 = vpop.permute.xlu0 %874
        %878 = vset.pattern.permute.xlu0 0
        %879 = vperm.xlu0 %878, %v869
        %v880 = vpop.permute.xlu0 %879
        %883 = vset.pattern.permute.xlu0 0
        %884 = vperm.xlu0 %883, %v870
        %v885 = vpop.permute.xlu0 %884
        %888 = vset.pattern.permute.xlu0 0
        %889 = vperm.xlu0 %888, %v871
        %v890 = vpop.permute.xlu0 %889
        %vm892 = vcmask 261120
        %v894 = vsel %vm892, %v864, 0
        %v897 = vsel %vm892, %v865, 0
        %v900 = vsel %vm892, %v866, 0
        %v903 = vsel %vm892, %v867, 0
        %905 = vmatprep.subr.mxu0 0.0
        %906 = vmatpush1.msra.mxu0 0.0
        %907 = vmatprep.subr.mxu0 0.0
        %908 = vmatpush1.msra.mxu0 0.0
        %909 = vmatprep.subr.mxu0 0.0
        %910 = vmatpush1.msra.mxu0 0.0
        %911 = vmatprep.subr.mxu0 0.0
        %912 = vmatpush1.msra.mxu0 0.0
        %913 = vmatprep.subr.mxu0 0.0
        %914 = vmatpush1.msra.mxu0 0.0
        %915 = vmatprep.subr.mxu0 0.0
        %916 = vmatpush1.msra.mxu0 0.0
        %917 = vmatprep.subr.mxu0 0.0
        %918 = vmatpush1.msra.mxu0 0.0
        %919 = vmatprep.subr.mxu0 0.0
        %920 = vmatpush1.msra.mxu0 0.0
        %921 = vmatprep.subr.mxu0 0.0
        %922 = vmatpush1.msra.mxu0 0.0
        %923 = vmatprep.subr.mxu0 0.0
        %924 = vmatpush1.msra.mxu0 0.0
        %925 = vmatprep.subr.mxu0 0.0
        %926 = vmatpush1.msra.mxu0 0.0
        %927 = vmatprep.subr.mxu0 0.0
        %928 = vmatpush1.msra.mxu0 0.0
        %929 = vmatprep.subr.mxu0 %v857
        %930 = vmatpush1.msra.mxu0 %v856
        %931 = vmatprep.subr.mxu0 %v849
        %932 = vmatpush1.msra.mxu0 %v848
        %933 = vmatprep.subr.mxu0 %v841
        %934 = vmatpush1.msra.mxu0 %v840
        %935 = vmatprep.subr.mxu0 %v833
        %936 = vmatpush1.msra.mxu0 %v832
        %937 = vmatprep.subr.mxu0 0.0
        %938 = vmatpush2.msra.mxu0 0.0
        %939 = vmatprep.subr.mxu0 0.0
        %940 = vmatpush2.msra.mxu0 0.0
        %941 = vmatprep.subr.mxu0 0.0
        %942 = vmatpush2.msra.mxu0 0.0
        %943 = vmatprep.subr.mxu0 0.0
        %944 = vmatpush2.msra.mxu0 0.0
        %945 = vmatprep.subr.mxu0 0.0
        %946 = vmatpush2.msra.mxu0 0.0
        %947 = vmatprep.subr.mxu0 0.0
        %948 = vmatpush2.msra.mxu0 0.0
        %949 = vmatprep.subr.mxu0 0.0
        %950 = vmatpush2.msra.mxu0 0.0
        %951 = vmatprep.subr.mxu0 0.0
        %952 = vmatpush2.msra.mxu0 0.0
        %953 = vmatprep.subr.mxu0 0.0
        %954 = vmatpush2.msra.mxu0 0.0
        %955 = vmatprep.subr.mxu0 0.0
        %956 = vmatpush2.msra.mxu0 0.0
        %957 = vmatprep.subr.mxu0 0.0
        %958 = vmatpush2.msra.mxu0 0.0
        %959 = vmatprep.subr.mxu0 0.0
        %960 = vmatpush2.msra.mxu0 0.0
        %961 = vmatprep.subr.mxu0 0.0
        %962 = vmatpush2.msra.mxu0 0.0
        %963 = vmatprep.subr.mxu0 0.0
        %964 = vmatpush2.msra.mxu0 0.0
        %965 = vmatprep.subr.mxu0 0.0
        %966 = vmatpush2.msra.mxu0 0.0
        %967 = vmatprep.subr.mxu0 0.0
        %968 = vmatpush2.msra.mxu0 0.0
        %969 = vmatprep.mubr.f32.mxu0 0.0
        %970 = vmatmul.mubr.f32.gmra.mxu0 %v894
        %v971 = vpop.f32.mrf.mxu0
        %v972 = vadd.f32 %v875, %v971
        %v973 = vpop.f32.mrf.mxu0
        %v974 = vadd.f32 %v875, %v973
        %975 = vmatprep.mubr.f32.mxu0 0.0
        %976 = vmatmul.mubr.f32.gmra.mxu0 %v897
        %v977 = vpop.f32.mrf.mxu0
        %v978 = vadd.f32 %v880, %v977
        %v979 = vpop.f32.mrf.mxu0
        %v980 = vadd.f32 %v880, %v979
        %981 = vmatprep.mubr.f32.mxu0 0.0
        %982 = vmatmul.mubr.f32.gmra.mxu0 %v900
        %v983 = vpop.f32.mrf.mxu0
        %v984 = vadd.f32 %v885, %v983
        %v985 = vpop.f32.mrf.mxu0
        %v986 = vadd.f32 %v885, %v985
        %987 = vmatprep.mubr.f32.mxu0 0.0
        %988 = vmatmul.mubr.f32.gmra.mxu0 %v903
        %v989 = vpop.f32.mrf.mxu0
        %v990 = vadd.f32 %v890, %v989
        %v991 = vpop.f32.mrf.mxu0
        %v992 = vadd.f32 %v890, %v991
        %993 = vdwg.mxu0
        %994 = vmatprep.subr.mxu0 0.0
        %995 = vmatpush1.msra.mxu0 0.0
        %996 = vmatprep.subr.mxu0 0.0
        %997 = vmatpush1.msra.mxu0 0.0
        %998 = vmatprep.subr.mxu0 0.0
        %999 = vmatpush1.msra.mxu0 0.0
        %1000 = vmatprep.subr.mxu0 0.0
        %1001 = vmatpush1.msra.mxu0 0.0
        %1002 = vmatprep.subr.mxu0 0.0
        %1003 = vmatpush1.msra.mxu0 0.0
        %1004 = vmatprep.subr.mxu0 0.0
        %1005 = vmatpush1.msra.mxu0 0.0
        %1006 = vmatprep.subr.mxu0 0.0
        %1007 = vmatpush1.msra.mxu0 0.0
        %1008 = vmatprep.subr.mxu0 0.0
        %1009 = vmatpush1.msra.mxu0 0.0
        %1010 = vmatprep.subr.mxu0 0.0
        %1011 = vmatpush1.msra.mxu0 0.0
        %1012 = vmatprep.subr.mxu0 0.0
        %1013 = vmatpush1.msra.mxu0 0.0
        %1014 = vmatprep.subr.mxu0 0.0
        %1015 = vmatpush1.msra.mxu0 0.0
        %1016 = vmatprep.subr.mxu0 0.0
        %1017 = vmatpush1.msra.mxu0 0.0
        %1018 = vmatprep.subr.mxu0 %v859
        %1019 = vmatpush1.msra.mxu0 %v858
        %1020 = vmatprep.subr.mxu0 %v851
        %1021 = vmatpush1.msra.mxu0 %v850
        %1022 = vmatprep.subr.mxu0 %v843
        %1023 = vmatpush1.msra.mxu0 %v842
        %1024 = vmatprep.subr.mxu0 %v835
        %1025 = vmatpush1.msra.mxu0 %v834
        %1026 = vmatprep.subr.mxu0 0.0
        %1027 = vmatpush2.msra.mxu0 0.0
        %1028 = vmatprep.subr.mxu0 0.0
        %1029 = vmatpush2.msra.mxu0 0.0
        %1030 = vmatprep.subr.mxu0 0.0
        %1031 = vmatpush2.msra.mxu0 0.0
        %1032 = vmatprep.subr.mxu0 0.0
        %1033 = vmatpush2.msra.mxu0 0.0
        %1034 = vmatprep.subr.mxu0 0.0
        %1035 = vmatpush2.msra.mxu0 0.0
        %1036 = vmatprep.subr.mxu0 0.0
        %1037 = vmatpush2.msra.mxu0 0.0
        %1038 = vmatprep.subr.mxu0 0.0
        %1039 = vmatpush2.msra.mxu0 0.0
        %1040 = vmatprep.subr.mxu0 0.0
        %1041 = vmatpush2.msra.mxu0 0.0
        %1042 = vmatprep.subr.mxu0 0.0
        %1043 = vmatpush2.msra.mxu0 0.0
        %1044 = vmatprep.subr.mxu0 0.0
        %1045 = vmatpush2.msra.mxu0 0.0
        %1046 = vmatprep.subr.mxu0 0.0
        %1047 = vmatpush2.msra.mxu0 0.0
        %1048 = vmatprep.subr.mxu0 0.0
        %1049 = vmatpush2.msra.mxu0 0.0
        %1050 = vmatprep.subr.mxu0 0.0
        %1051 = vmatpush2.msra.mxu0 0.0
        %1052 = vmatprep.subr.mxu0 0.0
        %1053 = vmatpush2.msra.mxu0 0.0
        %1054 = vmatprep.subr.mxu0 0.0
        %1055 = vmatpush2.msra.mxu0 0.0
        %1056 = vmatprep.subr.mxu0 0.0
        %1057 = vmatpush2.msra.mxu0 0.0
        %1058 = vmatprep.mubr.f32.mxu0 0.0
        %1059 = vmatmul.mubr.f32.gmra.mxu0 %v894
        %v1060 = vpop.f32.mrf.mxu0
        %v1061 = vadd.f32 %v875, %v1060
        %v1062 = vpop.f32.mrf.mxu0
        %v1063 = vadd.f32 %v875, %v1062
        %1064 = vmatprep.mubr.f32.mxu0 0.0
        %1065 = vmatmul.mubr.f32.gmra.mxu0 %v897
        %v1066 = vpop.f32.mrf.mxu0
        %v1067 = vadd.f32 %v880, %v1066
        %v1068 = vpop.f32.mrf.mxu0
        %v1069 = vadd.f32 %v880, %v1068
        %1070 = vmatprep.mubr.f32.mxu0 0.0
        %1071 = vmatmul.mubr.f32.gmra.mxu0 %v900
        %v1072 = vpop.f32.mrf.mxu0
        %v1073 = vadd.f32 %v885, %v1072
        %v1074 = vpop.f32.mrf.mxu0
        %v1075 = vadd.f32 %v885, %v1074
        %1076 = vmatprep.mubr.f32.mxu0 0.0
        %1077 = vmatmul.mubr.f32.gmra.mxu0 %v903
        %v1078 = vpop.f32.mrf.mxu0
        %v1079 = vadd.f32 %v890, %v1078
        %v1080 = vpop.f32.mrf.mxu0
        %v1081 = vadd.f32 %v890, %v1080
        %1082 = vdwg.mxu0
        %1083 = vmatprep.subr.mxu0 0.0
        %1084 = vmatpush1.msra.mxu0 0.0
        %1085 = vmatprep.subr.mxu0 0.0
        %1086 = vmatpush1.msra.mxu0 0.0
        %1087 = vmatprep.subr.mxu0 0.0
        %1088 = vmatpush1.msra.mxu0 0.0
        %1089 = vmatprep.subr.mxu0 0.0
        %1090 = vmatpush1.msra.mxu0 0.0
        %1091 = vmatprep.subr.mxu0 0.0
        %1092 = vmatpush1.msra.mxu0 0.0
        %1093 = vmatprep.subr.mxu0 0.0
        %1094 = vmatpush1.msra.mxu0 0.0
        %1095 = vmatprep.subr.mxu0 0.0
        %1096 = vmatpush1.msra.mxu0 0.0
        %1097 = vmatprep.subr.mxu0 0.0
        %1098 = vmatpush1.msra.mxu0 0.0
        %1099 = vmatprep.subr.mxu0 0.0
        %1100 = vmatpush1.msra.mxu0 0.0
        %1101 = vmatprep.subr.mxu0 0.0
        %1102 = vmatpush1.msra.mxu0 0.0
        %1103 = vmatprep.subr.mxu0 0.0
        %1104 = vmatpush1.msra.mxu0 0.0
        %1105 = vmatprep.subr.mxu0 0.0
        %1106 = vmatpush1.msra.mxu0 0.0
        %1107 = vmatprep.subr.mxu0 %v861
        %1108 = vmatpush1.msra.mxu0 %v860
        %1109 = vmatprep.subr.mxu0 %v853
        %1110 = vmatpush1.msra.mxu0 %v852
        %1111 = vmatprep.subr.mxu0 %v845
        %1112 = vmatpush1.msra.mxu0 %v844
        %1113 = vmatprep.subr.mxu0 %v837
        %1114 = vmatpush1.msra.mxu0 %v836
        %1115 = vmatprep.subr.mxu0 0.0
        %1116 = vmatpush2.msra.mxu0 0.0
        %1117 = vmatprep.subr.mxu0 0.0
        %1118 = vmatpush2.msra.mxu0 0.0
        %1119 = vmatprep.subr.mxu0 0.0
        %1120 = vmatpush2.msra.mxu0 0.0
        %1121 = vmatprep.subr.mxu0 0.0
        %1122 = vmatpush2.msra.mxu0 0.0
        %1123 = vmatprep.subr.mxu0 0.0
        %1124 = vmatpush2.msra.mxu0 0.0
        %1125 = vmatprep.subr.mxu0 0.0
        %1126 = vmatpush2.msra.mxu0 0.0
        %1127 = vmatprep.subr.mxu0 0.0
        %1128 = vmatpush2.msra.mxu0 0.0
        %1129 = vmatprep.subr.mxu0 0.0
        %1130 = vmatpush2.msra.mxu0 0.0
        %1131 = vmatprep.subr.mxu0 0.0
        %1132 = vmatpush2.msra.mxu0 0.0
        %1133 = vmatprep.subr.mxu0 0.0
        %1134 = vmatpush2.msra.mxu0 0.0
        %1135 = vmatprep.subr.mxu0 0.0
        %1136 = vmatpush2.msra.mxu0 0.0
        %1137 = vmatprep.subr.mxu0 0.0
        %1138 = vmatpush2.msra.mxu0 0.0
        %1139 = vmatprep.subr.mxu0 0.0
        %1140 = vmatpush2.msra.mxu0 0.0
        %1141 = vmatprep.subr.mxu0 0.0
        %1142 = vmatpush2.msra.mxu0 0.0
        %1143 = vmatprep.subr.mxu0 0.0
        %1144 = vmatpush2.msra.mxu0 0.0
        %1145 = vmatprep.subr.mxu0 0.0
        %1146 = vmatpush2.msra.mxu0 0.0
        %1147 = vmatprep.mubr.f32.mxu0 0.0
        %1148 = vmatmul.mubr.f32.gmra.mxu0 %v894
        %v1149 = vpop.f32.mrf.mxu0
        %v1150 = vadd.f32 %v875, %v1149
        %v1151 = vpop.f32.mrf.mxu0
        %v1152 = vadd.f32 %v875, %v1151
        %1153 = vmatprep.mubr.f32.mxu0 0.0
        %1154 = vmatmul.mubr.f32.gmra.mxu0 %v897
        %v1155 = vpop.f32.mrf.mxu0
        %v1156 = vadd.f32 %v880, %v1155
        %v1157 = vpop.f32.mrf.mxu0
        %v1158 = vadd.f32 %v880, %v1157
        %1159 = vmatprep.mubr.f32.mxu0 0.0
        %1160 = vmatmul.mubr.f32.gmra.mxu0 %v900
        %v1161 = vpop.f32.mrf.mxu0
        %v1162 = vadd.f32 %v885, %v1161
        %v1163 = vpop.f32.mrf.mxu0
        %v1164 = vadd.f32 %v885, %v1163
        %1165 = vmatprep.mubr.f32.mxu0 0.0
        %1166 = vmatmul.mubr.f32.gmra.mxu0 %v903
        %v1167 = vpop.f32.mrf.mxu0
        %v1168 = vadd.f32 %v890, %v1167
        %v1169 = vpop.f32.mrf.mxu0
        %v1170 = vadd.f32 %v890, %v1169
        %1171 = vdwg.mxu0
        %1172 = vmatprep.subr.mxu0 0.0
        %1173 = vmatpush1.msra.mxu0 0.0
        %1174 = vmatprep.subr.mxu0 0.0
        %1175 = vmatpush1.msra.mxu0 0.0
        %1176 = vmatprep.subr.mxu0 0.0
        %1177 = vmatpush1.msra.mxu0 0.0
        %1178 = vmatprep.subr.mxu0 0.0
        %1179 = vmatpush1.msra.mxu0 0.0
        %1180 = vmatprep.subr.mxu0 0.0
        %1181 = vmatpush1.msra.mxu0 0.0
        %1182 = vmatprep.subr.mxu0 0.0
        %1183 = vmatpush1.msra.mxu0 0.0
        %1184 = vmatprep.subr.mxu0 0.0
        %1185 = vmatpush1.msra.mxu0 0.0
        %1186 = vmatprep.subr.mxu0 0.0
        %1187 = vmatpush1.msra.mxu0 0.0
        %1188 = vmatprep.subr.mxu0 0.0
        %1189 = vmatpush1.msra.mxu0 0.0
        %1190 = vmatprep.subr.mxu0 0.0
        %1191 = vmatpush1.msra.mxu0 0.0
        %1192 = vmatprep.subr.mxu0 0.0
        %1193 = vmatpush1.msra.mxu0 0.0
        %1194 = vmatprep.subr.mxu0 0.0
        %1195 = vmatpush1.msra.mxu0 0.0
        %1196 = vmatprep.subr.mxu0 %v863
        %1197 = vmatpush1.msra.mxu0 %v862
        %1198 = vmatprep.subr.mxu0 %v855
        %1199 = vmatpush1.msra.mxu0 %v854
        %1200 = vmatprep.subr.mxu0 %v847
        %1201 = vmatpush1.msra.mxu0 %v846
        %1202 = vmatprep.subr.mxu0 %v839
        %1203 = vmatpush1.msra.mxu0 %v838
        %1204 = vmatprep.subr.mxu0 0.0
        %1205 = vmatpush2.msra.mxu0 0.0
        %1206 = vmatprep.subr.mxu0 0.0
        %1207 = vmatpush2.msra.mxu0 0.0
        %1208 = vmatprep.subr.mxu0 0.0
        %1209 = vmatpush2.msra.mxu0 0.0
        %1210 = vmatprep.subr.mxu0 0.0
        %1211 = vmatpush2.msra.mxu0 0.0
        %1212 = vmatprep.subr.mxu0 0.0
        %1213 = vmatpush2.msra.mxu0 0.0
        %1214 = vmatprep.subr.mxu0 0.0
        %1215 = vmatpush2.msra.mxu0 0.0
        %1216 = vmatprep.subr.mxu0 0.0
        %1217 = vmatpush2.msra.mxu0 0.0
        %1218 = vmatprep.subr.mxu0 0.0
        %1219 = vmatpush2.msra.mxu0 0.0
        %1220 = vmatprep.subr.mxu0 0.0
        %1221 = vmatpush2.msra.mxu0 0.0
        %1222 = vmatprep.subr.mxu0 0.0
        %1223 = vmatpush2.msra.mxu0 0.0
        %1224 = vmatprep.subr.mxu0 0.0
        %1225 = vmatpush2.msra.mxu0 0.0
        %1226 = vmatprep.subr.mxu0 0.0
        %1227 = vmatpush2.msra.mxu0 0.0
        %1228 = vmatprep.subr.mxu0 0.0
        %1229 = vmatpush2.msra.mxu0 0.0
        %1230 = vmatprep.subr.mxu0 0.0
        %1231 = vmatpush2.msra.mxu0 0.0
        %1232 = vmatprep.subr.mxu0 0.0
        %1233 = vmatpush2.msra.mxu0 0.0
        %1234 = vmatprep.subr.mxu0 0.0
        %1235 = vmatpush2.msra.mxu0 0.0
        %1236 = vmatprep.mubr.f32.mxu0 0.0
        %1237 = vmatmul.mubr.f32.gmra.mxu0 %v894
        %v1238 = vpop.f32.mrf.mxu0
        %v1239 = vadd.f32 %v875, %v1238
        %v1240 = vpop.f32.mrf.mxu0
        %v1241 = vadd.f32 %v875, %v1240
        %1242 = vmatprep.mubr.f32.mxu0 0.0
        %1243 = vmatmul.mubr.f32.gmra.mxu0 %v897
        %v1244 = vpop.f32.mrf.mxu0
        %v1245 = vadd.f32 %v880, %v1244
        %v1246 = vpop.f32.mrf.mxu0
        %v1247 = vadd.f32 %v880, %v1246
        %1248 = vmatprep.mubr.f32.mxu0 0.0
        %1249 = vmatmul.mubr.f32.gmra.mxu0 %v900
        %v1250 = vpop.f32.mrf.mxu0
        %v1251 = vadd.f32 %v885, %v1250
        %v1252 = vpop.f32.mrf.mxu0
        %v1253 = vadd.f32 %v885, %v1252
        %1254 = vmatprep.mubr.f32.mxu0 0.0
        %1255 = vmatmul.mubr.f32.gmra.mxu0 %v903
        %v1256 = vpop.f32.mrf.mxu0
        %v1257 = vadd.f32 %v890, %v1256
        %v1258 = vpop.f32.mrf.mxu0
        %v1259 = vadd.f32 %v890, %v1258
        %1260 = vdwg.mxu0
        %v1261 = vmax.f32 %v972, 0.0
        %v1262 = vmax.f32 %v974, 0.0
        %v1263 = vmax.f32 %v1061, 0.0
        %v1264 = vmax.f32 %v1063, 0.0
        %v1265 = vmax.f32 %v1150, 0.0
        %v1266 = vmax.f32 %v1152, 0.0
        %v1267 = vmax.f32 %v1239, 0.0
        %v1268 = vmax.f32 %v1241, 0.0
        %v1269 = vmax.f32 %v978, 0.0
        %v1270 = vmax.f32 %v980, 0.0
        %v1271 = vmax.f32 %v1067, 0.0
        %v1272 = vmax.f32 %v1069, 0.0
        %v1273 = vmax.f32 %v1156, 0.0
        %v1274 = vmax.f32 %v1158, 0.0
        %v1275 = vmax.f32 %v1245, 0.0
        %v1276 = vmax.f32 %v1247, 0.0
        %v1277 = vmax.f32 %v984, 0.0
        %v1278 = vmax.f32 %v986, 0.0
        %v1279 = vmax.f32 %v1073, 0.0
        %v1280 = vmax.f32 %v1075, 0.0
        %v1281 = vmax.f32 %v1162, 0.0
        %v1282 = vmax.f32 %v1164, 0.0
        %v1283 = vmax.f32 %v1251, 0.0
        %v1284 = vmax.f32 %v1253, 0.0
        %v1285 = vmax.f32 %v990, 0.0
        %v1286 = vmax.f32 %v992, 0.0
        %v1287 = vmax.f32 %v1079, 0.0
        %v1288 = vmax.f32 %v1081, 0.0
        %v1289 = vmax.f32 %v1168, 0.0
        %v1290 = vmax.f32 %v1170, 0.0
        %v1291 = vmax.f32 %v1257, 0.0
        %v1292 = vmax.f32 %v1259, 0.0
        %v1293 = vld [vmem:[%s5] sm:$0xff]
        %v1294 = vld [vmem:[%s5 + $0x8] sm:$0xff]
        %v1295 = vld [vmem:[%s5 + $0x10] sm:$0xff]
        %v1296 = vld [vmem:[%s5 + $0x18] sm:$0xff]
        %v1297 = vld [vmem:[%s6] sm:$0xff]
        %v1298 = vld [vmem:[%s6 + $0x8] sm:$0xff]
        %v1299 = vld [vmem:[%s6 + $0x10] sm:$0xff]
        %v1300 = vld [vmem:[%s6 + $0x18] sm:$0xff]
        %1302 = vset.pattern.permute.xlu0 0
        %1303 = vperm.xlu0 %1302, %v1297
        %v1304 = vpop.permute.xlu0 %1303
        %1307 = vset.pattern.permute.xlu0 0
        %1308 = vperm.xlu0 %1307, %v1298
        %v1309 = vpop.permute.xlu0 %1308
        %1312 = vset.pattern.permute.xlu0 0
        %1313 = vperm.xlu0 %1312, %v1299
        %v1314 = vpop.permute.xlu0 %1313
        %1317 = vset.pattern.permute.xlu0 0
        %1318 = vperm.xlu0 %1317, %v1300
        %v1319 = vpop.permute.xlu0 %1318
        %v1322 = vsel %vm892, %v1293, 0
        %v1325 = vsel %vm892, %v1294, 0
        %v1328 = vsel %vm892, %v1295, 0
        %v1331 = vsel %vm892, %v1296, 0
        %1333 = vmatprep.subr.mxu0 0.0
        %1334 = vmatpush1.msra.mxu0 0.0
        %1335 = vmatprep.subr.mxu0 0.0
        %1336 = vmatpush1.msra.mxu0 0.0
        %1337 = vmatprep.subr.mxu0 0.0
        %1338 = vmatpush1.msra.mxu0 0.0
        %1339 = vmatprep.subr.mxu0 0.0
        %1340 = vmatpush1.msra.mxu0 0.0
        %1341 = vmatprep.subr.mxu0 0.0
        %1342 = vmatpush1.msra.mxu0 0.0
        %1343 = vmatprep.subr.mxu0 0.0
        %1344 = vmatpush1.msra.mxu0 0.0
        %1345 = vmatprep.subr.mxu0 0.0
        %1346 = vmatpush1.msra.mxu0 0.0
        %1347 = vmatprep.subr.mxu0 0.0
        %1348 = vmatpush1.msra.mxu0 0.0
        %1349 = vmatprep.subr.mxu0 0.0
        %1350 = vmatpush1.msra.mxu0 0.0
        %1351 = vmatprep.subr.mxu0 0.0
        %1352 = vmatpush1.msra.mxu0 0.0
        %1353 = vmatprep.subr.mxu0 0.0
        %1354 = vmatpush1.msra.mxu0 0.0
        %1355 = vmatprep.subr.mxu0 0.0
        %1356 = vmatpush1.msra.mxu0 0.0
        %1357 = vmatprep.subr.mxu0 %v1286
        %1358 = vmatpush1.msra.mxu0 %v1285
        %1359 = vmatprep.subr.mxu0 %v1278
        %1360 = vmatpush1.msra.mxu0 %v1277
        %1361 = vmatprep.subr.mxu0 %v1270
        %1362 = vmatpush1.msra.mxu0 %v1269
        %1363 = vmatprep.subr.mxu0 %v1262
        %1364 = vmatpush1.msra.mxu0 %v1261
        %1365 = vmatprep.subr.mxu0 0.0
        %1366 = vmatpush2.msra.mxu0 0.0
        %1367 = vmatprep.subr.mxu0 0.0
        %1368 = vmatpush2.msra.mxu0 0.0
        %1369 = vmatprep.subr.mxu0 0.0
        %1370 = vmatpush2.msra.mxu0 0.0
        %1371 = vmatprep.subr.mxu0 0.0
        %1372 = vmatpush2.msra.mxu0 0.0
        %1373 = vmatprep.subr.mxu0 0.0
        %1374 = vmatpush2.msra.mxu0 0.0
        %1375 = vmatprep.subr.mxu0 0.0
        %1376 = vmatpush2.msra.mxu0 0.0
        %1377 = vmatprep.subr.mxu0 0.0
        %1378 = vmatpush2.msra.mxu0 0.0
        %1379 = vmatprep.subr.mxu0 0.0
        %1380 = vmatpush2.msra.mxu0 0.0
        %1381 = vmatprep.subr.mxu0 0.0
        %1382 = vmatpush2.msra.mxu0 0.0
        %1383 = vmatprep.subr.mxu0 0.0
        %1384 = vmatpush2.msra.mxu0 0.0
        %1385 = vmatprep.subr.mxu0 0.0
        %1386 = vmatpush2.msra.mxu0 0.0
        %1387 = vmatprep.subr.mxu0 0.0
        %1388 = vmatpush2.msra.mxu0 0.0
        %1389 = vmatprep.subr.mxu0 0.0
        %1390 = vmatpush2.msra.mxu0 0.0
        %1391 = vmatprep.subr.mxu0 0.0
        %1392 = vmatpush2.msra.mxu0 0.0
        %1393 = vmatprep.subr.mxu0 0.0
        %1394 = vmatpush2.msra.mxu0 0.0
        %1395 = vmatprep.subr.mxu0 0.0
        %1396 = vmatpush2.msra.mxu0 0.0
        %1397 = vmatprep.mubr.f32.mxu0 0.0
        %1398 = vmatmul.mubr.f32.gmra.mxu0 %v1322
        %v1399 = vpop.f32.mrf.mxu0
        %v1400 = vadd.f32 %v1304, %v1399
        %v1401 = vpop.f32.mrf.mxu0
        %v1402 = vadd.f32 %v1304, %v1401
        %1403 = vmatprep.mubr.f32.mxu0 0.0
        %1404 = vmatmul.mubr.f32.gmra.mxu0 %v1325
        %v1405 = vpop.f32.mrf.mxu0
        %v1406 = vadd.f32 %v1309, %v1405
        %v1407 = vpop.f32.mrf.mxu0
        %v1408 = vadd.f32 %v1309, %v1407
        %1409 = vmatprep.mubr.f32.mxu0 0.0
        %1410 = vmatmul.mubr.f32.gmra.mxu0 %v1328
        %v1411 = vpop.f32.mrf.mxu0
        %v1412 = vadd.f32 %v1314, %v1411
        %v1413 = vpop.f32.mrf.mxu0
        %v1414 = vadd.f32 %v1314, %v1413
        %1415 = vmatprep.mubr.f32.mxu0 0.0
        %1416 = vmatmul.mubr.f32.gmra.mxu0 %v1331
        %v1417 = vpop.f32.mrf.mxu0
        %v1418 = vadd.f32 %v1319, %v1417
        %v1419 = vpop.f32.mrf.mxu0
        %v1420 = vadd.f32 %v1319, %v1419
        %1421 = vdwg.mxu0
        %1422 = vmatprep.subr.mxu0 0.0
        %1423 = vmatpush1.msra.mxu0 0.0
        %1424 = vmatprep.subr.mxu0 0.0
        %1425 = vmatpush1.msra.mxu0 0.0
        %1426 = vmatprep.subr.mxu0 0.0
        %1427 = vmatpush1.msra.mxu0 0.0
        %1428 = vmatprep.subr.mxu0 0.0
        %1429 = vmatpush1.msra.mxu0 0.0
        %1430 = vmatprep.subr.mxu0 0.0
        %1431 = vmatpush1.msra.mxu0 0.0
        %1432 = vmatprep.subr.mxu0 0.0
        %1433 = vmatpush1.msra.mxu0 0.0
        %1434 = vmatprep.subr.mxu0 0.0
        %1435 = vmatpush1.msra.mxu0 0.0
        %1436 = vmatprep.subr.mxu0 0.0
        %1437 = vmatpush1.msra.mxu0 0.0
        %1438 = vmatprep.subr.mxu0 0.0
        %1439 = vmatpush1.msra.mxu0 0.0
        %1440 = vmatprep.subr.mxu0 0.0
        %1441 = vmatpush1.msra.mxu0 0.0
        %1442 = vmatprep.subr.mxu0 0.0
        %1443 = vmatpush1.msra.mxu0 0.0
        %1444 = vmatprep.subr.mxu0 0.0
        %1445 = vmatpush1.msra.mxu0 0.0
        %1446 = vmatprep.subr.mxu0 %v1288
        %1447 = vmatpush1.msra.mxu0 %v1287
        %1448 = vmatprep.subr.mxu0 %v1280
        %1449 = vmatpush1.msra.mxu0 %v1279
        %1450 = vmatprep.subr.mxu0 %v1272
        %1451 = vmatpush1.msra.mxu0 %v1271
        %1452 = vmatprep.subr.mxu0 %v1264
        %1453 = vmatpush1.msra.mxu0 %v1263
        %1454 = vmatprep.subr.mxu0 0.0
        %1455 = vmatpush2.msra.mxu0 0.0
        %1456 = vmatprep.subr.mxu0 0.0
        %1457 = vmatpush2.msra.mxu0 0.0
        %1458 = vmatprep.subr.mxu0 0.0
        %1459 = vmatpush2.msra.mxu0 0.0
        %1460 = vmatprep.subr.mxu0 0.0
        %1461 = vmatpush2.msra.mxu0 0.0
        %1462 = vmatprep.subr.mxu0 0.0
        %1463 = vmatpush2.msra.mxu0 0.0
        %1464 = vmatprep.subr.mxu0 0.0
        %1465 = vmatpush2.msra.mxu0 0.0
        %1466 = vmatprep.subr.mxu0 0.0
        %1467 = vmatpush2.msra.mxu0 0.0
        %1468 = vmatprep.subr.mxu0 0.0
        %1469 = vmatpush2.msra.mxu0 0.0
        %1470 = vmatprep.subr.mxu0 0.0
        %1471 = vmatpush2.msra.mxu0 0.0
        %1472 = vmatprep.subr.mxu0 0.0
        %1473 = vmatpush2.msra.mxu0 0.0
        %1474 = vmatprep.subr.mxu0 0.0
        %1475 = vmatpush2.msra.mxu0 0.0
        %1476 = vmatprep.subr.mxu0 0.0
        %1477 = vmatpush2.msra.mxu0 0.0
        %1478 = vmatprep.subr.mxu0 0.0
        %1479 = vmatpush2.msra.mxu0 0.0
        %1480 = vmatprep.subr.mxu0 0.0
        %1481 = vmatpush2.msra.mxu0 0.0
        %1482 = vmatprep.subr.mxu0 0.0
        %1483 = vmatpush2.msra.mxu0 0.0
        %1484 = vmatprep.subr.mxu0 0.0
        %1485 = vmatpush2.msra.mxu0 0.0
        %1486 = vmatprep.mubr.f32.mxu0 0.0
        %1487 = vmatmul.mubr.f32.gmra.mxu0 %v1322
        %v1488 = vpop.f32.mrf.mxu0
        %v1489 = vadd.f32 %v1304, %v1488
        %v1490 = vpop.f32.mrf.mxu0
        %v1491 = vadd.f32 %v1304, %v1490
        %1492 = vmatprep.mubr.f32.mxu0 0.0
        %1493 = vmatmul.mubr.f32.gmra.mxu0 %v1325
        %v1494 = vpop.f32.mrf.mxu0
        %v1495 = vadd.f32 %v1309, %v1494
        %v1496 = vpop.f32.mrf.mxu0
        %v1497 = vadd.f32 %v1309, %v1496
        %1498 = vmatprep.mubr.f32.mxu0 0.0
        %1499 = vmatmul.mubr.f32.gmra.mxu0 %v1328
        %v1500 = vpop.f32.mrf.mxu0
        %v1501 = vadd.f32 %v1314, %v1500
        %v1502 = vpop.f32.mrf.mxu0
        %v1503 = vadd.f32 %v1314, %v1502
        %1504 = vmatprep.mubr.f32.mxu0 0.0
        %1505 = vmatmul.mubr.f32.gmra.mxu0 %v1331
        %v1506 = vpop.f32.mrf.mxu0
        %v1507 = vadd.f32 %v1319, %v1506
        %v1508 = vpop.f32.mrf.mxu0
        %v1509 = vadd.f32 %v1319, %v1508
        %1510 = vdwg.mxu0
        %1511 = vmatprep.subr.mxu0 0.0
        %1512 = vmatpush1.msra.mxu0 0.0
        %1513 = vmatprep.subr.mxu0 0.0
        %1514 = vmatpush1.msra.mxu0 0.0
        %1515 = vmatprep.subr.mxu0 0.0
        %1516 = vmatpush1.msra.mxu0 0.0
        %1517 = vmatprep.subr.mxu0 0.0
        %1518 = vmatpush1.msra.mxu0 0.0
        %1519 = vmatprep.subr.mxu0 0.0
        %1520 = vmatpush1.msra.mxu0 0.0
        %1521 = vmatprep.subr.mxu0 0.0
        %1522 = vmatpush1.msra.mxu0 0.0
        %1523 = vmatprep.subr.mxu0 0.0
        %1524 = vmatpush1.msra.mxu0 0.0
        %1525 = vmatprep.subr.mxu0 0.0
        %1526 = vmatpush1.msra.mxu0 0.0
        %1527 = vmatprep.subr.mxu0 0.0
        %1528 = vmatpush1.msra.mxu0 0.0
        %1529 = vmatprep.subr.mxu0 0.0
        %1530 = vmatpush1.msra.mxu0 0.0
        %1531 = vmatprep.subr.mxu0 0.0
        %1532 = vmatpush1.msra.mxu0 0.0
        %1533 = vmatprep.subr.mxu0 0.0
        %1534 = vmatpush1.msra.mxu0 0.0
        %1535 = vmatprep.subr.mxu0 %v1290
        %1536 = vmatpush1.msra.mxu0 %v1289
        %1537 = vmatprep.subr.mxu0 %v1282
        %1538 = vmatpush1.msra.mxu0 %v1281
        %1539 = vmatprep.subr.mxu0 %v1274
        %1540 = vmatpush1.msra.mxu0 %v1273
        %1541 = vmatprep.subr.mxu0 %v1266
        %1542 = vmatpush1.msra.mxu0 %v1265
        %1543 = vmatprep.subr.mxu0 0.0
        %1544 = vmatpush2.msra.mxu0 0.0
        %1545 = vmatprep.subr.mxu0 0.0
        %1546 = vmatpush2.msra.mxu0 0.0
        %1547 = vmatprep.subr.mxu0 0.0
        %1548 = vmatpush2.msra.mxu0 0.0
        %1549 = vmatprep.subr.mxu0 0.0
        %1550 = vmatpush2.msra.mxu0 0.0
        %1551 = vmatprep.subr.mxu0 0.0
        %1552 = vmatpush2.msra.mxu0 0.0
        %1553 = vmatprep.subr.mxu0 0.0
        %1554 = vmatpush2.msra.mxu0 0.0
        %1555 = vmatprep.subr.mxu0 0.0
        %1556 = vmatpush2.msra.mxu0 0.0
        %1557 = vmatprep.subr.mxu0 0.0
        %1558 = vmatpush2.msra.mxu0 0.0
        %1559 = vmatprep.subr.mxu0 0.0
        %1560 = vmatpush2.msra.mxu0 0.0
        %1561 = vmatprep.subr.mxu0 0.0
        %1562 = vmatpush2.msra.mxu0 0.0
        %1563 = vmatprep.subr.mxu0 0.0
        %1564 = vmatpush2.msra.mxu0 0.0
        %1565 = vmatprep.subr.mxu0 0.0
        %1566 = vmatpush2.msra.mxu0 0.0
        %1567 = vmatprep.subr.mxu0 0.0
        %1568 = vmatpush2.msra.mxu0 0.0
        %1569 = vmatprep.subr.mxu0 0.0
        %1570 = vmatpush2.msra.mxu0 0.0
        %1571 = vmatprep.subr.mxu0 0.0
        %1572 = vmatpush2.msra.mxu0 0.0
        %1573 = vmatprep.subr.mxu0 0.0
        %1574 = vmatpush2.msra.mxu0 0.0
        %1575 = vmatprep.mubr.f32.mxu0 0.0
        %1576 = vmatmul.mubr.f32.gmra.mxu0 %v1322
        %v1577 = vpop.f32.mrf.mxu0
        %v1578 = vadd.f32 %v1304, %v1577
        %v1579 = vpop.f32.mrf.mxu0
        %v1580 = vadd.f32 %v1304, %v1579
        %1581 = vmatprep.mubr.f32.mxu0 0.0
        %1582 = vmatmul.mubr.f32.gmra.mxu0 %v1325
        %v1583 = vpop.f32.mrf.mxu0
        %v1584 = vadd.f32 %v1309, %v1583
        %v1585 = vpop.f32.mrf.mxu0
        %v1586 = vadd.f32 %v1309, %v1585
        %1587 = vmatprep.mubr.f32.mxu0 0.0
        %1588 = vmatmul.mubr.f32.gmra.mxu0 %v1328
        %v1589 = vpop.f32.mrf.mxu0
        %v1590 = vadd.f32 %v1314, %v1589
        %v1591 = vpop.f32.mrf.mxu0
        %v1592 = vadd.f32 %v1314, %v1591
        %1593 = vmatprep.mubr.f32.mxu0 0.0
        %1594 = vmatmul.mubr.f32.gmra.mxu0 %v1331
        %v1595 = vpop.f32.mrf.mxu0
        %v1596 = vadd.f32 %v1319, %v1595
        %v1597 = vpop.f32.mrf.mxu0
        %v1598 = vadd.f32 %v1319, %v1597
        %1599 = vdwg.mxu0
        %1600 = vmatprep.subr.mxu0 0.0
        %1601 = vmatpush1.msra.mxu0 0.0
        %1602 = vmatprep.subr.mxu0 0.0
        %1603 = vmatpush1.msra.mxu0 0.0
        %1604 = vmatprep.subr.mxu0 0.0
        %1605 = vmatpush1.msra.mxu0 0.0
        %1606 = vmatprep.subr.mxu0 0.0
        %1607 = vmatpush1.msra.mxu0 0.0
        %1608 = vmatprep.subr.mxu0 0.0
        %1609 = vmatpush1.msra.mxu0 0.0
        %1610 = vmatprep.subr.mxu0 0.0
        %1611 = vmatpush1.msra.mxu0 0.0
        %1612 = vmatprep.subr.mxu0 0.0
        %1613 = vmatpush1.msra.mxu0 0.0
        %1614 = vmatprep.subr.mxu0 0.0
        %1615 = vmatpush1.msra.mxu0 0.0
        %1616 = vmatprep.subr.mxu0 0.0
        %1617 = vmatpush1.msra.mxu0 0.0
        %1618 = vmatprep.subr.mxu0 0.0
        %1619 = vmatpush1.msra.mxu0 0.0
        %1620 = vmatprep.subr.mxu0 0.0
        %1621 = vmatpush1.msra.mxu0 0.0
        %1622 = vmatprep.subr.mxu0 0.0
        %1623 = vmatpush1.msra.mxu0 0.0
        %1624 = vmatprep.subr.mxu0 %v1292
        %1625 = vmatpush1.msra.mxu0 %v1291
        %1626 = vmatprep.subr.mxu0 %v1284
        %1627 = vmatpush1.msra.mxu0 %v1283
        %1628 = vmatprep.subr.mxu0 %v1276
        %1629 = vmatpush1.msra.mxu0 %v1275
        %1630 = vmatprep.subr.mxu0 %v1268
        %1631 = vmatpush1.msra.mxu0 %v1267
        %1632 = vmatprep.subr.mxu0 0.0
        %1633 = vmatpush2.msra.mxu0 0.0
        %1634 = vmatprep.subr.mxu0 0.0
        %1635 = vmatpush2.msra.mxu0 0.0
        %1636 = vmatprep.subr.mxu0 0.0
        %1637 = vmatpush2.msra.mxu0 0.0
        %1638 = vmatprep.subr.mxu0 0.0
        %1639 = vmatpush2.msra.mxu0 0.0
        %1640 = vmatprep.subr.mxu0 0.0
        %1641 = vmatpush2.msra.mxu0 0.0
        %1642 = vmatprep.subr.mxu0 0.0
        %1643 = vmatpush2.msra.mxu0 0.0
        %1644 = vmatprep.subr.mxu0 0.0
        %1645 = vmatpush2.msra.mxu0 0.0
        %1646 = vmatprep.subr.mxu0 0.0
        %1647 = vmatpush2.msra.mxu0 0.0
        %1648 = vmatprep.subr.mxu0 0.0
        %1649 = vmatpush2.msra.mxu0 0.0
        %1650 = vmatprep.subr.mxu0 0.0
        %1651 = vmatpush2.msra.mxu0 0.0
        %1652 = vmatprep.subr.mxu0 0.0
        %1653 = vmatpush2.msra.mxu0 0.0
        %1654 = vmatprep.subr.mxu0 0.0
        %1655 = vmatpush2.msra.mxu0 0.0
        %1656 = vmatprep.subr.mxu0 0.0
        %1657 = vmatpush2.msra.mxu0 0.0
        %1658 = vmatprep.subr.mxu0 0.0
        %1659 = vmatpush2.msra.mxu0 0.0
        %1660 = vmatprep.subr.mxu0 0.0
        %1661 = vmatpush2.msra.mxu0 0.0
        %1662 = vmatprep.subr.mxu0 0.0
        %1663 = vmatpush2.msra.mxu0 0.0
        %1664 = vmatprep.mubr.f32.mxu0 0.0
        %1665 = vmatmul.mubr.f32.gmra.mxu0 %v1322
        %v1666 = vpop.f32.mrf.mxu0
        %v1667 = vadd.f32 %v1304, %v1666
        %v1668 = vpop.f32.mrf.mxu0
        %v1669 = vadd.f32 %v1304, %v1668
        %1670 = vmatprep.mubr.f32.mxu0 0.0
        %1671 = vmatmul.mubr.f32.gmra.mxu0 %v1325
        %v1672 = vpop.f32.mrf.mxu0
        %v1673 = vadd.f32 %v1309, %v1672
        %v1674 = vpop.f32.mrf.mxu0
        %v1675 = vadd.f32 %v1309, %v1674
        %1676 = vmatprep.mubr.f32.mxu0 0.0
        %1677 = vmatmul.mubr.f32.gmra.mxu0 %v1328
        %v1678 = vpop.f32.mrf.mxu0
        %v1679 = vadd.f32 %v1314, %v1678
        %v1680 = vpop.f32.mrf.mxu0
        %v1681 = vadd.f32 %v1314, %v1680
        %1682 = vmatprep.mubr.f32.mxu0 0.0
        %1683 = vmatmul.mubr.f32.gmra.mxu0 %v1331
        %v1684 = vpop.f32.mrf.mxu0
        %v1685 = vadd.f32 %v1319, %v1684
        %v1686 = vpop.f32.mrf.mxu0
        %v1687 = vadd.f32 %v1319, %v1686
        %1688 = vdwg.mxu0
        %v1689 = vmax.f32 %v1400, 0.0
        %v1690 = vmax.f32 %v1402, 0.0
        %v1691 = vmax.f32 %v1489, 0.0
        %v1692 = vmax.f32 %v1491, 0.0
        %v1693 = vmax.f32 %v1578, 0.0
        %v1694 = vmax.f32 %v1580, 0.0
        %v1695 = vmax.f32 %v1667, 0.0
        %v1696 = vmax.f32 %v1669, 0.0
        %v1697 = vmax.f32 %v1406, 0.0
        %v1698 = vmax.f32 %v1408, 0.0
        %v1699 = vmax.f32 %v1495, 0.0
        %v1700 = vmax.f32 %v1497, 0.0
        %v1701 = vmax.f32 %v1584, 0.0
        %v1702 = vmax.f32 %v1586, 0.0
        %v1703 = vmax.f32 %v1673, 0.0
        %v1704 = vmax.f32 %v1675, 0.0
        %v1705 = vmax.f32 %v1412, 0.0
        %v1706 = vmax.f32 %v1414, 0.0
        %v1707 = vmax.f32 %v1501, 0.0
        %v1708 = vmax.f32 %v1503, 0.0
        %v1709 = vmax.f32 %v1590, 0.0
        %v1710 = vmax.f32 %v1592, 0.0
        %v1711 = vmax.f32 %v1679, 0.0
        %v1712 = vmax.f32 %v1681, 0.0
        %v1713 = vmax.f32 %v1418, 0.0
        %v1714 = vmax.f32 %v1420, 0.0
        %v1715 = vmax.f32 %v1507, 0.0
        %v1716 = vmax.f32 %v1509, 0.0
        %v1717 = vmax.f32 %v1596, 0.0
        %v1718 = vmax.f32 %v1598, 0.0
        %v1719 = vmax.f32 %v1685, 0.0
        %v1720 = vmax.f32 %v1687, 0.0
        %v1721 = vld [vmem:[%s7] sm:$0xff]
        %v1722 = vld [vmem:[%s7 + $0x8] sm:$0xff]
        %v1723 = vld [vmem:[%s7 + $0x10] sm:$0xff]
        %v1724 = vld [vmem:[%s7 + $0x18] sm:$0xff]
        %v1725 = vld [vmem:[#allocation2] sm:$0x1]
        %1727 = vset.pattern.permute.xlu0 0
        %1728 = vperm.xlu0 %1727, %v1721
        %v1729 = vpop.permute.xlu0 %1728
        %1732 = vset.pattern.permute.xlu0 0
        %1733 = vperm.xlu0 %1732, %v1722
        %v1734 = vpop.permute.xlu0 %1733
        %1737 = vset.pattern.permute.xlu0 0
        %1738 = vperm.xlu0 %1737, %v1723
        %v1739 = vpop.permute.xlu0 %1738
        %1742 = vset.pattern.permute.xlu0 0
        %1743 = vperm.xlu0 %1742, %v1724
        %v1744 = vpop.permute.xlu0 %1743
        %v1746 = vmul.f32 %v1729, %v1689
        %v1747 = vmul.f32 %v1729, %v1690
        %v1748 = vmul.f32 %v1729, %v1691
        %v1749 = vmul.f32 %v1729, %v1692
        %v1750 = vmul.f32 %v1729, %v1693
        %v1751 = vmul.f32 %v1729, %v1694
        %v1752 = vmul.f32 %v1729, %v1695
        %v1753 = vmul.f32 %v1729, %v1696
        %v1754 = vmul.f32 %v1734, %v1697
        %v1755 = vmul.f32 %v1734, %v1698
        %v1756 = vmul.f32 %v1734, %v1699
        %v1757 = vmul.f32 %v1734, %v1700
        %v1758 = vmul.f32 %v1734, %v1701
        %v1759 = vmul.f32 %v1734, %v1702
        %v1760 = vmul.f32 %v1734, %v1703
        %v1761 = vmul.f32 %v1734, %v1704
        %v1762 = vmul.f32 %v1739, %v1705
        %v1763 = vmul.f32 %v1739, %v1706
        %v1764 = vmul.f32 %v1739, %v1707
        %v1765 = vmul.f32 %v1739, %v1708
        %v1766 = vmul.f32 %v1739, %v1709
        %v1767 = vmul.f32 %v1739, %v1710
        %v1768 = vmul.f32 %v1739, %v1711
        %v1769 = vmul.f32 %v1739, %v1712
        %v1770 = vmul.f32 %v1744, %v1713
        %v1771 = vmul.f32 %v1744, %v1714
        %v1772 = vmul.f32 %v1744, %v1715
        %v1773 = vmul.f32 %v1744, %v1716
        %v1774 = vmul.f32 %v1744, %v1717
        %v1775 = vmul.f32 %v1744, %v1718
        %v1776 = vmul.f32 %v1744, %v1719
        %v1777 = vmul.f32 %v1744, %v1720
        %v1778 = vadd.f32 %v1746, %v1754
        %v1779 = vadd.f32 %v1778, %v1762
        %v1780 = vadd.f32 %v1779, %v1770
        %v1781 = vrot.slane %v1780, 4
        %v1782 = vadd.f32 %v1780, %v1781
        %v1783 = vrot.slane %v1782, 2
        %v1784 = vadd.f32 %v1782, %v1783
        %v1785 = vrot.slane %v1784, 1
        %v1786 = vadd.f32 %v1784, %v1785
        %v1787 = vadd.f32 %v1747, %v1755
        %v1788 = vadd.f32 %v1787, %v1763
        %v1789 = vadd.f32 %v1788, %v1771
        %v1790 = vrot.slane %v1789, 4
        %v1791 = vadd.f32 %v1789, %v1790
        %v1792 = vrot.slane %v1791, 2
        %v1793 = vadd.f32 %v1791, %v1792
        %v1794 = vrot.slane %v1793, 1
        %v1795 = vadd.f32 %v1793, %v1794
        %v1796 = vadd.f32 %v1748, %v1756
        %v1797 = vadd.f32 %v1796, %v1764
        %v1798 = vadd.f32 %v1797, %v1772
        %v1799 = vrot.slane %v1798, 4
        %v1800 = vadd.f32 %v1798, %v1799
        %v1801 = vrot.slane %v1800, 2
        %v1802 = vadd.f32 %v1800, %v1801
        %v1803 = vrot.slane %v1802, 1
        %v1804 = vadd.f32 %v1802, %v1803
        %v1805 = vadd.f32 %v1749, %v1757
        %v1806 = vadd.f32 %v1805, %v1765
        %v1807 = vadd.f32 %v1806, %v1773
        %v1808 = vrot.slane %v1807, 4
        %v1809 = vadd.f32 %v1807, %v1808
        %v1810 = vrot.slane %v1809, 2
        %v1811 = vadd.f32 %v1809, %v1810
        %v1812 = vrot.slane %v1811, 1
        %v1813 = vadd.f32 %v1811, %v1812
        %v1814 = vadd.f32 %v1750, %v1758
        %v1815 = vadd.f32 %v1814, %v1766
        %v1816 = vadd.f32 %v1815, %v1774
        %v1817 = vrot.slane %v1816, 4
        %v1818 = vadd.f32 %v1816, %v1817
        %v1819 = vrot.slane %v1818, 2
        %v1820 = vadd.f32 %v1818, %v1819
        %v1821 = vrot.slane %v1820, 1
        %v1822 = vadd.f32 %v1820, %v1821
        %v1823 = vadd.f32 %v1751, %v1759
        %v1824 = vadd.f32 %v1823, %v1767
        %v1825 = vadd.f32 %v1824, %v1775
        %v1826 = vrot.slane %v1825, 4
        %v1827 = vadd.f32 %v1825, %v1826
        %v1828 = vrot.slane %v1827, 2
        %v1829 = vadd.f32 %v1827, %v1828
        %v1830 = vrot.slane %v1829, 1
        %v1831 = vadd.f32 %v1829, %v1830
        %v1832 = vadd.f32 %v1752, %v1760
        %v1833 = vadd.f32 %v1832, %v1768
        %v1834 = vadd.f32 %v1833, %v1776
        %v1835 = vrot.slane %v1834, 4
        %v1836 = vadd.f32 %v1834, %v1835
        %v1837 = vrot.slane %v1836, 2
        %v1838 = vadd.f32 %v1836, %v1837
        %v1839 = vrot.slane %v1838, 1
        %v1840 = vadd.f32 %v1838, %v1839
        %v1841 = vadd.f32 %v1753, %v1761
        %v1842 = vadd.f32 %v1841, %v1769
        %v1843 = vadd.f32 %v1842, %v1777
        %v1844 = vrot.slane %v1843, 4
        %v1845 = vadd.f32 %v1843, %v1844
        %v1846 = vrot.slane %v1845, 2
        %v1847 = vadd.f32 %v1845, %v1846
        %v1848 = vrot.slane %v1847, 1
        %v1849 = vadd.f32 %v1847, %v1848
        %1851 = vset.pattern.permute.xlu0 0
        %1852 = vperm.xlu0 %1851, %v1725
        %v1853 = vpop.permute.xlu0 %1852
        %v1855 = vlaneseq
        %v1856 = vshrl.u32 %v1855, 7
        %v1857 = vsub.s32 0, %v1856
        %v1858 = vrot.slane %v1853, %v1857
        %v1859 = vadd.f32 %v1786, %v1858
        %v1860 = vadd.f32 %v1795, %v1858
        %v1861 = vadd.f32 %v1804, %v1858
        %v1862 = vadd.f32 %v1813, %v1858
        %v1863 = vadd.f32 %v1822, %v1858
        %v1864 = vadd.f32 %v1831, %v1858
        %v1865 = vadd.f32 %v1840, %v1858
        %v1866 = vadd.f32 %v1849, %v1858
        %v1875 = vcombine.low %v1859, %v1860
        %v1876 = vcombine.low %v1861, %v1862
        %v1877 = vcombine.low %v1863, %v1864
        %v1878 = vcombine.low %v1865, %v1866
        %v1880 = vunpack.c.l.s4 1966171168
        %v1881 = vunpack.c.0.s8 %v1880
        %v1882 = vlaneseq
        %v1883 = vshrl.u32 %v1882, 7
        %v1884 = vsub.s32 %v1881, %v1883
        %v1885 = vrot.slane %v1875, %v1884
        %v1887 = vunpack.c.l.s4 1966171168
        %v1888 = vunpack.c.0.s8 %v1887
        %v1889 = vlaneseq
        %v1890 = vshrl.u32 %v1889, 7
        %v1891 = vsub.s32 %v1888, %v1890
        %v1892 = vrot.slane %v1876, %v1891
        %v1894 = vunpack.c.l.s4 1966171168
        %v1895 = vunpack.c.0.s8 %v1894
        %v1896 = vlaneseq
        %v1897 = vshrl.u32 %v1896, 7
        %v1898 = vsub.s32 %v1895, %v1897
        %v1899 = vrot.slane %v1877, %v1898
        %v1901 = vunpack.c.l.s4 1966171168
        %v1902 = vunpack.c.0.s8 %v1901
        %v1903 = vlaneseq
        %v1904 = vshrl.u32 %v1903, 7
        %v1905 = vsub.s32 %v1902, %v1904
        %v1906 = vrot.slane %v1878, %v1905
        %v1907 = vcombine.low %v1885, %v1892
        %v1908 = vcombine.low %v1899, %v1906
        %v1910 = vunpack.c.l.s4 1966171168
        %v1911 = vunpack.c.0.s8 %v1910
        %v1912 = vlaneseq
        %v1913 = vshrl.u32 %v1912, 7
        %v1914 = vsub.s32 %v1911, %v1913
        %v1915 = vrot.slane %v1907, %v1914
        %v1917 = vunpack.c.l.s4 1966171168
        %v1918 = vunpack.c.0.s8 %v1917
        %v1919 = vlaneseq
        %v1920 = vshrl.u32 %v1919, 7
        %v1921 = vsub.s32 %v1918, %v1920
        %v1922 = vrot.slane %v1908, %v1921
        %v1923 = vcombine.low %v1915, %v1922
        %1925 = vst [vmem:[%s328] sm:$0xff] %v1923
        %s1926 = sand.u32 %s227, 1
        %s1927 = scalar_lea.sflag [#allocation4], %s1926
        %s1928 = sand.u32 %s227, 1
        %s1929 = smul.addr %s1928, 8
        %s1930 = scalar_lea.vmem [#allocation3], %s1929
        // Predicated region
        $region57: #{tpu_custom_call.1} parent=55 // pred_check
          %p1931 = pneg %p237
        $region58: #{tpu_custom_call.1} parent=55 // pred_check_branch
          %1933 = sbr.rel (%p1931) target = $region60
        $region59: #{tpu_custom_call.1} parent=55 // pred_region
          %s1934 = smul.u32 8, %s25
          %s1936 = ssub.s32 128, 128
          %1937 = vsyncadd %s1927, %s1936
          %s1938 = smul.addr %s1934, 16
          %s1939 = scalar_lea.hbm %s9, %s1938
          %s1941 = sshll.u32 %s1930, 4
          %s1942 = int_to_ptr.vmem [resolvable:$true] %s1941
          %1944 = dma.vmem_to_hbm [thread:$0]  %s1942, 128, %s1939, %s1927
        $region60: #{tpu_custom_call.1} parent=55 // pred_fallthru
          _
      $region56: #{tpu_custom_call.1} parent=5 // pred_fallthru
        _
      %p1945 = scmp.le.s32.totalorder 2, %s20
      // Predicated region
      $region61: #{tpu_custom_call.1} parent=5 // pred_check
        %p1946 = pneg %p1945
      $region62: #{tpu_custom_call.1} parent=5 // pred_check_branch
        %1948 = sbr.rel (%p1946) target = $region64
      $region63: #{tpu_custom_call.1} parent=5 // pred_region
        %s1949 = ssub.s32 %s20, 2
        // Predicated region
        $region65: #{tpu_custom_call.1} parent=63 // pred_check
          %p1950 = pneg %p243
        $region66: #{tpu_custom_call.1} parent=63 // pred_check_branch
          %1952 = sbr.rel (%p1950) target = $region68
        $region67: #{tpu_custom_call.1} parent=63 // pred_region
          %s1953 = sand.u32 %s228, 1
          %s1954 = scalar_lea.sflag [#allocation4], %s1953
          %s1955 = sand.u32 %s228, 1
          %s1956 = smul.addr %s1955, 8
          %s1957 = scalar_lea.vmem [#allocation3], %s1956
          %1958 = dma.done %s1954, 128
        $region68: #{tpu_custom_call.1} parent=63 // pred_fallthru
          _
      $region64: #{tpu_custom_call.1} parent=5 // pred_fallthru
        _
    $region6: #{tpu_custom_call.1} parent=1 // loop_footer
      %s24 = sadd.s32 1, %s20
    $region7: #{tpu_custom_call.1} parent=1 // loop_footer_branch
      %19 = sbr.rel target = $region3
    $region8: #{tpu_custom_call.1} parent=1 // loop_exit
      _
    %1959 = vsyncpa [#allocation4], 1
    %s1960 = scalar_lea.sflag [#allocation4], 1
    %1961 = vsyncpa %s1960, 1

</llo_original>
